<compile_context>
chip_gen: v5e
topology: v5e:2x2
jax: 0.10.0
libtpu: 0.0.40
codegen_flags: <defaults>
</compile_context>

<pallas_src>
import functools
import math

import numpy as np
import jax
import jax.numpy as jnp
from jax.experimental import pallas as pl
from jax.experimental.pallas import tpu as pltpu


def _round_up(x, m):
    return ((x + m - 1) // m) * m


# ----------------------------------------------------------------------------
# Pallas kernel: Nb batch elements per grid step, everything fused.
#   x_ref     : (Nb*C, HWp)    bf16  flattened-spatial input
#   poolT_ref : (HWp, Pt)      bf16  concat of kron(Ah,Aw)^T per scale (+zero pad)
#   upT_ref   : (Pt, HWp)      bf16  concat of kron(Uh,Uw)^T per scale (+zero pad)
#   gw_ref    : (1, Pt)        f32   upsample replication count / (H*W)
#   maskb_ref : (3C, Pt)       f32   0/1 scale-block mask (row i*C+c -> block i)
#   watt_ref  : (3C, 3C)       f32   conv_atten weight
#   gavg_ref  : (3C, 3C)       f32   block-diag GroupNorm group-average matrix
#   gamma_ref, beta_ref : (3C, 1) f32  GN affine
#   wout_ref  : (Cout, 3C)     bf16  final 1x1 conv weight
#   out_ref   : (Nb*Cout, HWp) f32
# ----------------------------------------------------------------------------
def mafa_kernel(x_ref, poolT_ref, upT_ref, gw_ref, maskb_ref,
                watt_ref, gavg_ref, gamma_ref, beta_ref, wout_ref,
                out_ref, *, nb, cin):
    # Adaptive-avg-pool of every scale, for all Nb*C channel rows at once.
    pooled = jnp.dot(x_ref[...], poolT_ref[...],
                     preferred_element_type=jnp.float32)        # (Nb*C, Pt) f32

    gw = gw_ref[...]
    maskb = maskb_ref[...]
    watt = watt_ref[...]
    gavg = gavg_ref[...]
    gamma = gamma_ref[...]
    beta = beta_ref[...]
    wout = wout_ref[...]

    mixed_blocks = []
    for n in range(nb):                          # static unroll, nb is small
        pn = pooled[n * cin:(n + 1) * cin, :]                    # (C, Pt)
        # "xc" in the pooled domain: row i*C+c holds scale-i pooled channel c.
        pstack = jnp.concatenate([pn, pn, pn], axis=0) * maskb   # (3C, Pt)

        # Global average over the virtual upsampled HxW grid (exact weights).
        g = jnp.sum(pstack * gw, axis=1, keepdims=True)          # (3C, 1)

        # FSM attention: sigmoid(GroupNorm32(W_att @ g)); tiny matvecs in f32.
        a = jnp.dot(watt, g, preferred_element_type=jnp.float32)
        mu = jnp.dot(gavg, a, preferred_element_type=jnp.float32)
        d = a - mu
        var = jnp.dot(gavg, d * d, preferred_element_type=jnp.float32)
        atten = jax.nn.sigmoid(d * jax.lax.rsqrt(var + 1e-5) * gamma + beta)

        # xc * (1 + atten) and the final 1x1 conv, still in the pooled domain.
        xg = (pstack * (1.0 + atten)).astype(wout.dtype)         # (3C, Pt) bf16
        mixed_blocks.append(
            jnp.dot(wout, xg, preferred_element_type=jnp.float32))   # (Cout, Pt)

    # One nearest-upsample matmul for the whole batch block: lane-dense
    # (Nb*Cout, HWp) output written in a single store.
    mixed = jnp.concatenate(mixed_blocks, axis=0).astype(upT_ref.dtype)
    out_ref[...] = jnp.dot(mixed, upT_ref[...],
                           preferred_element_type=jnp.float32
                           ).astype(out_ref.dtype)


# ----------------------------------------------------------------------------
# Host-side operator construction (glue; plain numpy/JAX).
# ----------------------------------------------------------------------------
def _adaptive_pool_matrix(in_size, out_size):
    """A[i, p] = 1/len(window_i) for p in window_i (PyTorch adaptive_avg_pool)."""
    A = np.zeros((out_size, in_size), np.float32)
    for i in range(out_size):
        start = (i * in_size) // out_size
        end = -((-(i + 1) * in_size) // out_size)   # ceil((i+1)*in/out)
        A[i, start:end] = 1.0 / (end - start)
    return A


def _nearest_interp_matrix(out_size, in_size):
    """B[i, src] = 1 with src = floor(i * in / out) (PyTorch mode='nearest')."""
    B = np.zeros((out_size, in_size), np.float32)
    for i in range(out_size):
        src = min((i * in_size) // out_size, in_size - 1)
        B[i, src] = 1.0
    return B


def make_mafa_params(C, Cout, H, W, key, pool_ratios=(0.1, 0.2, 0.3),
                     num_groups=32):
    """Builds fused-kernel operands (f32) plus dense reference operators."""
    C3 = 3 * C
    assert C3 % num_groups == 0, "GroupNorm(32) requires 3*C % 32 == 0"
    cpg = C3 // num_groups
    HW = H * W
    HWp = _round_up(HW, 128)

    sizes = [max(1, int(round(r * H))) for r in pool_ratios]
    blocks = []
    dense_ops = []            # dense (HW,HW) operators, reference-check only
    for s in sizes:
        Ah = _adaptive_pool_matrix(H, s)
        Aw = _adaptive_pool_matrix(W, s)
        Uh = _nearest_interp_matrix(H, s)
        Uw = _nearest_interp_matrix(W, s)
        pool_op = np.kron(Ah, Aw)                 # (s*s, HW)
        up_op = np.kron(Uh, Uw)                   # (HW, s*s)
        blocks.append((pool_op, up_op))
        dense_ops.append((up_op @ pool_op).astype(np.float32))

    Pt = _round_up(sum(p.shape[0] for p, _ in blocks), 8)
    poolT = np.zeros((HWp, Pt), np.float32)
    upT = np.zeros((Pt, HWp), np.float32)
    gw = np.zeros((1, Pt), np.float32)
    maskb = np.zeros((C3, Pt), np.float32)
    off = 0
    for i, (pool_op, up_op) in enumerate(blocks):
        ss = pool_op.shape[0]
        poolT[:HW, off:off + ss] = pool_op.T
        upT[off:off + ss, :HW] = up_op.T
        gw[0, off:off + ss] = up_op.sum(axis=0) / float(HW)
        maskb[i * C:(i + 1) * C, off:off + ss] = 1.0
        off += ss

    # c2_xavier_fill == kaiming_uniform(a=1): bound = sqrt(3 / fan_in)
    k1, k2 = jax.random.split(key)
    b = math.sqrt(3.0 / C3)
    watt = jax.random.uniform(k1, (C3, C3), jnp.float32, -b, b)
    wout = jax.random.uniform(k2, (Cout, C3), jnp.float32, -b, b)
    gamma = jnp.ones((C3, 1), jnp.float32)
    beta = jnp.zeros((C3, 1), jnp.float32)
    gavg = jnp.asarray(np.kron(np.eye(num_groups, dtype=np.float32),
                               np.full((cpg, cpg), 1.0 / cpg, np.float32)))

    params = dict(poolT=jnp.asarray(poolT), upT=jnp.asarray(upT),
                  gw=jnp.asarray(gw), maskb=jnp.asarray(maskb),
                  watt=watt, gavg=gavg, gamma=gamma, beta=beta, wout=wout)
    return params, dense_ops


def mafa_forward(x, params, block_n=4):
    """x: (N, C, H, W) f32 -> (N, Cout, H, W) f32."""
    N, C, H, W = x.shape
    HW = H * W
    poolT, upT = params["poolT"], params["upT"]
    gw, maskb = params["gw"], params["maskb"]
    watt, gavg = params["watt"], params["gavg"]
    gamma, beta, wout = params["gamma"], params["beta"], params["wout"]
    HWp, Pt = poolT.shape
    C3 = watt.shape[0]
    Cout = wout.shape[0]
    assert C3 == 3 * C

    Nb = max(1, min(block_n, N))
    Np = _round_up(N, Nb)
    steps = Np // Nb

    # lane-pad spatial to HWp, pad batch to a multiple of Nb, cast to bf16
    xf = jnp.pad(x.reshape(N, C, HW), ((0, Np - N), (0, 0), (0, HWp - HW)))
    xf = xf.reshape(Np * C, HWp).astype(jnp.bfloat16)
    poolT_b = poolT.astype(jnp.bfloat16)
    upT_b = upT.astype(jnp.bfloat16)
    wout_b = wout.astype(jnp.bfloat16)

    flops = steps * (2 * Nb * C * HWp * Pt
                     + Nb * (6 * C3 * C3 + 2 * Cout * C3 * Pt)
                     + 2 * Nb * Cout * Pt * HWp)
    const_bytes = ((poolT_b.size + upT_b.size + wout_b.size) * 2
                   + (watt.size + gavg.size + gamma.size + beta.size
                      + gw.size + maskb.size) * 4)
    bytes_accessed = int(xf.size * 2 + Np * Cout * HWp * 4 + const_bytes)

    kernel = functools.partial(mafa_kernel, nb=Nb, cin=C)

    out = pl.pallas_call(
        kernel,
        out_shape=jax.ShapeDtypeStruct((Np * Cout, HWp), jnp.float32),
        grid_spec=pltpu.PrefetchScalarGridSpec(
            num_scalar_prefetch=0,
            grid=(steps,),
            in_specs=[
                pl.BlockSpec((Nb * C, HWp), lambda n: (n, 0)),    # x
                pl.BlockSpec((HWp, Pt), lambda n: (0, 0)),        # poolT
                pl.BlockSpec((Pt, HWp), lambda n: (0, 0)),        # upT
                pl.BlockSpec((1, Pt), lambda n: (0, 0)),          # gw
                pl.BlockSpec((C3, Pt), lambda n: (0, 0)),         # maskb
                pl.BlockSpec((C3, C3), lambda n: (0, 0)),         # watt
                pl.BlockSpec((C3, C3), lambda n: (0, 0)),         # gavg
                pl.BlockSpec((C3, 1), lambda n: (0, 0)),          # gamma
                pl.BlockSpec((C3, 1), lambda n: (0, 0)),          # beta
                pl.BlockSpec((Cout, C3), lambda n: (0, 0)),       # wout
            ],
            out_specs=pl.BlockSpec((Nb * Cout, HWp), lambda n: (n, 0)),
        ),
        compiler_params=pltpu.CompilerParams(
            dimension_semantics=("parallel",)),
        cost_estimate=pl.CostEstimate(
            flops=int(flops),
            transcendentals=int(steps * Nb * 2 * C3),
            bytes_accessed=bytes_accessed),
    )(xf, poolT_b, upT_b, gw, maskb, watt, gavg, gamma, beta, wout_b)

    out = out.reshape(Np, Cout, HWp)[:N, :, :HW]
    return out.reshape(N, Cout, H, W)


# ----------------------------------------------------------------------------
# Plain-JAX f32 reference using the dense (HW,HW) spatial operators.
# ----------------------------------------------------------------------------
def mafa_reference(x, dense_ops, params, num_groups=32):
    N, C, H, W = x.shape
    HW = H * W
    watt = params["watt"]
    wout = params["wout"]
    gamma = params["gamma"].reshape(-1)
    beta = params["beta"].reshape(-1)
    C3 = watt.shape[0]
    cpg = C3 // num_groups

    xf = x.reshape(N, C, HW)
    ys = [jnp.einsum('nch,kh->nck', xf, jnp.asarray(M)) for M in dense_ops]
    xc = jnp.concatenate(ys, axis=1)                          # (N, 3C, HW)
    g = jnp.mean(xc, axis=2)                                  # (N, 3C)
    a = g @ watt.T
    ar = a.reshape(N, num_groups, cpg)
    mu = jnp.mean(ar, axis=2, keepdims=True)
    var = jnp.mean((ar - mu) ** 2, axis=2, keepdims=True)
    ahat = ((ar - mu) * jax.lax.rsqrt(var + 1e-5)).reshape(N, C3)
    atten = jax.nn.sigmoid(ahat * gamma[None, :] + beta[None, :])
    out = jnp.einsum('oc,nch->noh', wout, xc * (1.0 + atten)[:, :, None])
    return out.reshape(N, wout.shape[0], H, W)


if __name__ == "__main__":
    # small shapes: N=4, input C=32 (FSM in_chan = 96, divisible by 32 GN
    # groups), H=W=20, out_chan=16.  block_n=2 -> two "parallel" grid steps.
    N, C, H, W, Cout = 4, 32, 20, 20, 16

    key = jax.random.PRNGKey(0)
    kx, kp = jax.random.split(key)
    x = jax.random.normal(kx, (N, C, H, W), jnp.float32)
    params, dense_ops = make_mafa_params(C, Cout, H, W, kp)

    out = mafa_forward(x, params, block_n=2)
    jax.block_until_ready(out)
    assert out.shape == (N, Cout, H, W)

    # loose sanity check against the dense-operator f32 reference (kernel
    # matmuls use bf16 operands with f32 accumulation).
    ref = mafa_reference(x, dense_ops, params)
    err = float(jnp.max(jnp.abs(out - ref)) / (jnp.max(jnp.abs(ref)) + 1e-6))
    assert err < 1e-1, f"kernel/reference mismatch: rel-max-err={err:.4f}"
    print("KERNEL_OK")
</pallas_src>

<mosaic_0001>
module attributes {stable_mosaic.version = 11 : i64} {
  func.func @mafa_kernel(%arg0: i32, %arg1: memref<64x512xbf16, #tpu.memory_space<vmem>>, %arg2: memref<512x56xbf16, #tpu.memory_space<vmem>>, %arg3: memref<56x512xbf16, #tpu.memory_space<vmem>>, %arg4: memref<1x56xf32, #tpu.memory_space<vmem>>, %arg5: memref<96x56xf32, #tpu.memory_space<vmem>>, %arg6: memref<96x96xf32, #tpu.memory_space<vmem>>, %arg7: memref<96x96xf32, #tpu.memory_space<vmem>>, %arg8: memref<96x1xf32, #tpu.memory_space<vmem>>, %arg9: memref<96x1xf32, #tpu.memory_space<vmem>>, %arg10: memref<16x96xbf16, #tpu.memory_space<vmem>>, %arg11: memref<32x512xf32, #tpu.memory_space<vmem>>) attributes {dimension_semantics = [#tpu.dimension_semantics<parallel>], iteration_bounds = array<i64: 2>, scalar_prefetch = 0 : i64, scratch_operands = 0 : i64, tpu.core_type = #tpu.core_type<tc>, window_params = [{transform_indices = @transform_0, window_bounds = array<i64: 64, 512>}, {pipeline_mode = #tpu.pipeline_mode<synchronous>, transform_indices = @transform_1, window_bounds = array<i64: 512, 56>}, {pipeline_mode = #tpu.pipeline_mode<synchronous>, transform_indices = @transform_2, window_bounds = array<i64: 56, 512>}, {pipeline_mode = #tpu.pipeline_mode<synchronous>, transform_indices = @transform_3, window_bounds = array<i64: 1, 56>}, {pipeline_mode = #tpu.pipeline_mode<synchronous>, transform_indices = @transform_4, window_bounds = array<i64: 96, 56>}, {pipeline_mode = #tpu.pipeline_mode<synchronous>, transform_indices = @transform_5, window_bounds = array<i64: 96, 96>}, {pipeline_mode = #tpu.pipeline_mode<synchronous>, transform_indices = @transform_6, window_bounds = array<i64: 96, 96>}, {pipeline_mode = #tpu.pipeline_mode<synchronous>, transform_indices = @transform_7, window_bounds = array<i64: 96, 1>}, {pipeline_mode = #tpu.pipeline_mode<synchronous>, transform_indices = @transform_8, window_bounds = array<i64: 96, 1>}, {pipeline_mode = #tpu.pipeline_mode<synchronous>, transform_indices = @transform_9, window_bounds = array<i64: 16, 96>}, {transform_indices = @transform_10, window_bounds = array<i64: 32, 512>}]} {
    %c0 = arith.constant 0 : index
    %c0_0 = arith.constant 0 : index
    %0 = vector.load %arg1[%c0, %c0_0] : memref<64x512xbf16, #tpu.memory_space<vmem>>, vector<64x512xbf16>
    %c0_1 = arith.constant 0 : index
    %c0_2 = arith.constant 0 : index
    %1 = vector.load %arg2[%c0_1, %c0_2] : memref<512x56xbf16, #tpu.memory_space<vmem>>, vector<512x56xbf16>
    %cst = arith.constant dense<0.000000e+00> : vector<64x56xf32>
    %2 = tpu.matmul %0, %1, %cst {dimension_numbers = #tpu.dot_dimension_numbers<[1], [0], [0], [1], [0, 0, 1, 1], [], []>} : vector<64x512xbf16>, vector<512x56xbf16>, vector<64x56xf32> -> vector<64x56xf32>
    %c0_3 = arith.constant 0 : index
    %c0_4 = arith.constant 0 : index
    %3 = vector.load %arg4[%c0_3, %c0_4] : memref<1x56xf32, #tpu.memory_space<vmem>>, vector<1x56xf32>
    %c0_5 = arith.constant 0 : index
    %c0_6 = arith.constant 0 : index
    %4 = vector.load %arg5[%c0_5, %c0_6] : memref<96x56xf32, #tpu.memory_space<vmem>>, vector<96x56xf32>
    %c0_7 = arith.constant 0 : index
    %c0_8 = arith.constant 0 : index
    %5 = vector.load %arg6[%c0_7, %c0_8] : memref<96x96xf32, #tpu.memory_space<vmem>>, vector<96x96xf32>
    %c0_9 = arith.constant 0 : index
    %c0_10 = arith.constant 0 : index
    %6 = vector.load %arg7[%c0_9, %c0_10] : memref<96x96xf32, #tpu.memory_space<vmem>>, vector<96x96xf32>
    %c0_11 = arith.constant 0 : index
    %c0_12 = arith.constant 0 : index
    %7 = vector.load %arg8[%c0_11, %c0_12] : memref<96x1xf32, #tpu.memory_space<vmem>>, vector<96x1xf32>
    %c0_13 = arith.constant 0 : index
    %c0_14 = arith.constant 0 : index
    %8 = vector.load %arg9[%c0_13, %c0_14] : memref<96x1xf32, #tpu.memory_space<vmem>>, vector<96x1xf32>
    %c0_15 = arith.constant 0 : index
    %c0_16 = arith.constant 0 : index
    %9 = vector.load %arg10[%c0_15, %c0_16] : memref<16x96xbf16, #tpu.memory_space<vmem>>, vector<16x96xbf16>
    %10 = vector.extract_strided_slice %2 {offsets = [0, 0], sizes = [32, 56], strides = [1, 1]} : vector<64x56xf32> to vector<32x56xf32>
    %11 = tpu.concatenate %10, %10, %10 in 0 : vector<32x56xf32>, vector<32x56xf32>, vector<32x56xf32> -> vector<96x56xf32>
    %12 = arith.mulf %11, %4 : vector<96x56xf32>
    %13 = vector.broadcast %3 : vector<1x56xf32> to vector<96x56xf32>
    %14 = arith.mulf %12, %13 : vector<96x56xf32>
    %cst_17 = arith.constant dense<0.000000e+00> : vector<96xf32>
    %15 = vector.multi_reduction <add>, %14, %cst_17 [1] : vector<96x56xf32> to vector<96xf32>
    %16 = vector.shape_cast %15 : vector<96xf32> to vector<96x1xf32>
    %cst_18 = arith.constant dense<0.000000e+00> : vector<96x1xf32>
    %17 = tpu.matmul %5, %16, %cst_18 {dimension_numbers = #tpu.dot_dimension_numbers<[1], [0], [0], [1], [0, 0, 1, 1], [], []>} : vector<96x96xf32>, vector<96x1xf32>, vector<96x1xf32> -> vector<96x1xf32>
    %cst_19 = arith.constant dense<0.000000e+00> : vector<96x1xf32>
    %18 = tpu.matmul %6, %17, %cst_19 {dimension_numbers = #tpu.dot_dimension_numbers<[1], [0], [0], [1], [0, 0, 1, 1], [], []>} : vector<96x96xf32>, vector<96x1xf32>, vector<96x1xf32> -> vector<96x1xf32>
    %19 = arith.subf %17, %18 : vector<96x1xf32>
    %20 = arith.mulf %19, %19 : vector<96x1xf32>
    %cst_20 = arith.constant dense<0.000000e+00> : vector<96x1xf32>
    %21 = tpu.matmul %6, %20, %cst_20 {dimension_numbers = #tpu.dot_dimension_numbers<[1], [0], [0], [1], [0, 0, 1, 1], [], []>} : vector<96x96xf32>, vector<96x1xf32>, vector<96x1xf32> -> vector<96x1xf32>
    %cst_21 = arith.constant 9.99999974E-6 : f32
    %22 = vector.broadcast %cst_21 : f32 to vector<96x1xf32>
    %23 = arith.addf %21, %22 : vector<96x1xf32>
    %24 = math.rsqrt %23 : vector<96x1xf32>
    %25 = arith.mulf %19, %24 : vector<96x1xf32>
    %26 = arith.mulf %25, %7 : vector<96x1xf32>
    %27 = arith.addf %26, %8 : vector<96x1xf32>
    %28 = arith.negf %27 : vector<96x1xf32>
    %29 = math.exp %28 : vector<96x1xf32>
    %cst_22 = arith.constant 1.000000e+00 : f32
    %30 = vector.broadcast %cst_22 : f32 to vector<96x1xf32>
    %31 = arith.addf %30, %29 : vector<96x1xf32>
    %32 = arith.divf %30, %31 : vector<96x1xf32>
    %cst_23 = arith.constant 1.000000e+00 : f32
    %33 = vector.broadcast %cst_23 : f32 to vector<96x1xf32>
    %34 = arith.addf %33, %32 : vector<96x1xf32>
    %35 = vector.broadcast %34 : vector<96x1xf32> to vector<96x56xf32>
    %36 = arith.mulf %12, %35 : vector<96x56xf32>
    %37 = arith.truncf %36 : vector<96x56xf32> to vector<96x56xbf16>
    %cst_24 = arith.constant dense<0.000000e+00> : vector<16x56xf32>
    %38 = tpu.matmul %9, %37, %cst_24 {dimension_numbers = #tpu.dot_dimension_numbers<[1], [0], [0], [1], [0, 0, 1, 1], [], []>} : vector<16x96xbf16>, vector<96x56xbf16>, vector<16x56xf32> -> vector<16x56xf32>
    %39 = vector.extract_strided_slice %2 {offsets = [32, 0], sizes = [32, 56], strides = [1, 1]} : vector<64x56xf32> to vector<32x56xf32>
    %40 = tpu.concatenate %39, %39, %39 in 0 : vector<32x56xf32>, vector<32x56xf32>, vector<32x56xf32> -> vector<96x56xf32>
    %41 = arith.mulf %40, %4 : vector<96x56xf32>
    %42 = vector.broadcast %3 : vector<1x56xf32> to vector<96x56xf32>
    %43 = arith.mulf %41, %42 : vector<96x56xf32>
    %cst_25 = arith.constant dense<0.000000e+00> : vector<96xf32>
    %44 = vector.multi_reduction <add>, %43, %cst_25 [1] : vector<96x56xf32> to vector<96xf32>
    %45 = vector.shape_cast %44 : vector<96xf32> to vector<96x1xf32>
    %cst_26 = arith.constant dense<0.000000e+00> : vector<96x1xf32>
    %46 = tpu.matmul %5, %45, %cst_26 {dimension_numbers = #tpu.dot_dimension_numbers<[1], [0], [0], [1], [0, 0, 1, 1], [], []>} : vector<96x96xf32>, vector<96x1xf32>, vector<96x1xf32> -> vector<96x1xf32>
    %cst_27 = arith.constant dense<0.000000e+00> : vector<96x1xf32>
    %47 = tpu.matmul %6, %46, %cst_27 {dimension_numbers = #tpu.dot_dimension_numbers<[1], [0], [0], [1], [0, 0, 1, 1], [], []>} : vector<96x96xf32>, vector<96x1xf32>, vector<96x1xf32> -> vector<96x1xf32>
    %48 = arith.subf %46, %47 : vector<96x1xf32>
    %49 = arith.mulf %48, %48 : vector<96x1xf32>
    %cst_28 = arith.constant dense<0.000000e+00> : vector<96x1xf32>
    %50 = tpu.matmul %6, %49, %cst_28 {dimension_numbers = #tpu.dot_dimension_numbers<[1], [0], [0], [1], [0, 0, 1, 1], [], []>} : vector<96x96xf32>, vector<96x1xf32>, vector<96x1xf32> -> vector<96x1xf32>
    %cst_29 = arith.constant 9.99999974E-6 : f32
    %51 = vector.broadcast %cst_29 : f32 to vector<96x1xf32>
    %52 = arith.addf %50, %51 : vector<96x1xf32>
    %53 = math.rsqrt %52 : vector<96x1xf32>
    %54 = arith.mulf %48, %53 : vector<96x1xf32>
    %55 = arith.mulf %54, %7 : vector<96x1xf32>
    %56 = arith.addf %55, %8 : vector<96x1xf32>
    %57 = arith.negf %56 : vector<96x1xf32>
    %58 = math.exp %57 : vector<96x1xf32>
    %cst_30 = arith.constant 1.000000e+00 : f32
    %59 = vector.broadcast %cst_30 : f32 to vector<96x1xf32>
    %60 = arith.addf %59, %58 : vector<96x1xf32>
    %61 = arith.divf %59, %60 : vector<96x1xf32>
    %cst_31 = arith.constant 1.000000e+00 : f32
    %62 = vector.broadcast %cst_31 : f32 to vector<96x1xf32>
    %63 = arith.addf %62, %61 : vector<96x1xf32>
    %64 = vector.broadcast %63 : vector<96x1xf32> to vector<96x56xf32>
    %65 = arith.mulf %41, %64 : vector<96x56xf32>
    %66 = arith.truncf %65 : vector<96x56xf32> to vector<96x56xbf16>
    %cst_32 = arith.constant dense<0.000000e+00> : vector<16x56xf32>
    %67 = tpu.matmul %9, %66, %cst_32 {dimension_numbers = #tpu.dot_dimension_numbers<[1], [0], [0], [1], [0, 0, 1, 1], [], []>} : vector<16x96xbf16>, vector<96x56xbf16>, vector<16x56xf32> -> vector<16x56xf32>
    %68 = tpu.concatenate %38, %67 in 0 : vector<16x56xf32>, vector<16x56xf32> -> vector<32x56xf32>
    %69 = arith.truncf %68 : vector<32x56xf32> to vector<32x56xbf16>
    %c0_33 = arith.constant 0 : index
    %c0_34 = arith.constant 0 : index
    %70 = vector.load %arg3[%c0_33, %c0_34] : memref<56x512xbf16, #tpu.memory_space<vmem>>, vector<56x512xbf16>
    %cst_35 = arith.constant dense<0.000000e+00> : vector<32x512xf32>
    %71 = tpu.matmul %69, %70, %cst_35 {dimension_numbers = #tpu.dot_dimension_numbers<[1], [0], [0], [1], [0, 0, 1, 1], [], []>} : vector<32x56xbf16>, vector<56x512xbf16>, vector<32x512xf32> -> vector<32x512xf32>
    %c0_36 = arith.constant 0 : index
    %c0_37 = arith.constant 0 : index
    %72 = vector.load %arg11[%c0_36, %c0_37] : memref<32x512xf32, #tpu.memory_space<vmem>>, vector<32x512xf32>
    tpu.vector_store %arg11[%c0_36, %c0_37], %71 {strides = array<i32>} : memref<32x512xf32, #tpu.memory_space<vmem>>, vector<32x512xf32>,
    return
  }
  func.func @transform_0(%arg0: i32) -> (i32, i32) {
    %c0_i32 = arith.constant 0 : i32
    %c0_i32_0 = arith.constant 0 : i32
    return %arg0, %c0_i32 : i32, i32
  }
  func.func @transform_1(%arg0: i32) -> (i32, i32) {
    %c0_i32 = arith.constant 0 : i32
    %c0_i32_0 = arith.constant 0 : i32
    %c0_i32_1 = arith.constant 0 : i32
    return %c0_i32, %c0_i32_0 : i32, i32
  }
  func.func @transform_2(%arg0: i32) -> (i32, i32) {
    %c0_i32 = arith.constant 0 : i32
    %c0_i32_0 = arith.constant 0 : i32
    %c0_i32_1 = arith.constant 0 : i32
    return %c0_i32, %c0_i32_0 : i32, i32
  }
  func.func @transform_3(%arg0: i32) -> (i32, i32) {
    %c0_i32 = arith.constant 0 : i32
    %c0_i32_0 = arith.constant 0 : i32
    %c0_i32_1 = arith.constant 0 : i32
    return %c0_i32, %c0_i32_0 : i32, i32
  }
  func.func @transform_4(%arg0: i32) -> (i32, i32) {
    %c0_i32 = arith.constant 0 : i32
    %c0_i32_0 = arith.constant 0 : i32
    %c0_i32_1 = arith.constant 0 : i32
    return %c0_i32, %c0_i32_0 : i32, i32
  }
  func.func @transform_5(%arg0: i32) -> (i32, i32) {
    %c0_i32 = arith.constant 0 : i32
    %c0_i32_0 = arith.constant 0 : i32
    %c0_i32_1 = arith.constant 0 : i32
    return %c0_i32, %c0_i32_0 : i32, i32
  }
  func.func @transform_6(%arg0: i32) -> (i32, i32) {
    %c0_i32 = arith.constant 0 : i32
    %c0_i32_0 = arith.constant 0 : i32
    %c0_i32_1 = arith.constant 0 : i32
    return %c0_i32, %c0_i32_0 : i32, i32
  }
  func.func @transform_7(%arg0: i32) -> (i32, i32) {
    %c0_i32 = arith.constant 0 : i32
    %c0_i32_0 = arith.constant 0 : i32
    %c0_i32_1 = arith.constant 0 : i32
    return %c0_i32, %c0_i32_0 : i32, i32
  }
  func.func @transform_8(%arg0: i32) -> (i32, i32) {
    %c0_i32 = arith.constant 0 : i32
    %c0_i32_0 = arith.constant 0 : i32
    %c0_i32_1 = arith.constant 0 : i32
    return %c0_i32, %c0_i32_0 : i32, i32
  }
  func.func @transform_9(%arg0: i32) -> (i32, i32) {
    %c0_i32 = arith.constant 0 : i32
    %c0_i32_0 = arith.constant 0 : i32
    %c0_i32_1 = arith.constant 0 : i32
    return %c0_i32, %c0_i32_0 : i32, i32
  }
  func.func @transform_10(%arg0: i32) -> (i32, i32) {
    %c0_i32 = arith.constant 0 : i32
    %c0_i32_0 = arith.constant 0 : i32
    return %arg0, %c0_i32 : i32, i32
  }
}

</mosaic_0001>

<llo_original>
// kernel: tpu_custom_call.1
$region0: #{tpu_custom_call.1}
  #allocation0 [shape = 'u32[]', space=smem, size = 0x4, offset = 0x4, fixed_abs, tag = 'smem constant byte address 0x4 - core index']
  #allocation1 [shape = 'u32[72,128]{1,0:T(1,128)}', space=vmem, size = 0x9000, scoped, tag = 'internal scratch']
  %s0 = inlined_call_operand.vmem [shape: bf16[128,512], index: 0, kind: input, shape index: {}]
  %s1 = inlined_call_operand.vmem [shape: bf16[512,56], index: 1, kind: input, shape index: {}]
  %s2 = inlined_call_operand.vmem [shape: bf16[56,512], index: 2, kind: input, shape index: {}]
  %s3 = inlined_call_operand.vmem [shape: f32[1,56], index: 3, kind: input, shape index: {}]
  %s4 = inlined_call_operand.vmem [shape: f32[96,56], index: 4, kind: input, shape index: {}]
  %s5 = inlined_call_operand.vmem [shape: f32[96,96], index: 5, kind: input, shape index: {}]
  %s6 = inlined_call_operand.vmem [shape: f32[96,96], index: 6, kind: input, shape index: {}]
  %s7 = inlined_call_operand.vmem [shape: f32[96,1], index: 7, kind: input, shape index: {}]
  %s8 = inlined_call_operand.vmem [shape: f32[96,1], index: 8, kind: input, shape index: {}]
  %s9 = inlined_call_operand.vmem [shape: bf16[16,96], index: 9, kind: input, shape index: {}]
  %s10 = inlined_call_operand.hbm [shape: f32[64,512], index: 10, kind: output, shape index: {}]
  %s11 = sld [smem:[#allocation0]]
  $region73: #{tpu_custom_call.1} parent=0
    _
  %s13 = ssub.s32 1, %s11
  %s14 = scalar_select 0, %s13, %s11
  $region1: #{tpu_custom_call.1} parent=0
    #allocation2 [shape = 'u8[131072]{0}', space=vmem, size = 0x20000, scoped, tag = 'output window, operand 0']
    #allocation3 [shape = 's32[2]{0}', space=sflag, size = 0x8, scoped, tag = 'scoped memory for tpu_custom_call.1']
    %15 = vsyncpa [#allocation3], 0
    %s16 = scalar_lea.sflag [#allocation3], 1
    %17 = vsyncpa %s16, 0
    loop: start=0, step=1, limit=4
    $region2: #{tpu_custom_call.1} parent=1 // loop_pre_header
      _
    $region3: #{tpu_custom_call.1} parent=1 // loop_header
      %s19 = sphi 0, %s23
      %p20 = scmp.ge.s32.totalorder %s19, 4
      %s29 = sphi 0, %s31
      %s32 = sphi 0, %s29
      %s33 = sphi 0, %s32
      %s49 = sphi 0, %s33
      %s53 = sphi 0, %s53
      %s55 = sphi 0, %s53
      %s56 = sphi 0, %s55
      %s70 = sphi 0, %s56
      %s74 = sphi 0, %s74
      %s76 = sphi 0, %s74
      %s77 = sphi 0, %s76
      %s91 = sphi 0, %s77
      %s95 = sphi 0, %s95
      %s97 = sphi 0, %s95
      %s98 = sphi 0, %s97
      %s112 = sphi 0, %s98
      %s116 = sphi 0, %s116
      %s118 = sphi 0, %s116
      %s119 = sphi 0, %s118
      %s133 = sphi 0, %s119
      %s137 = sphi 0, %s137
      %s139 = sphi 0, %s137
      %s140 = sphi 0, %s139
      %s154 = sphi 0, %s140
      %s158 = sphi 0, %s158
      %s160 = sphi 0, %s158
      %s161 = sphi 0, %s160
      %s175 = sphi 0, %s161
      %s179 = sphi 0, %s179
      %s181 = sphi 0, %s179
      %s182 = sphi 0, %s181
      %s196 = sphi 0, %s182
      %s200 = sphi 0, %s200
      %s202 = sphi 0, %s200
      %s203 = sphi 0, %s202
      %s217 = sphi 0, %s203
      %s221 = sphi 0, %s221
      %s223 = sphi 0, %s221
      %s224 = sphi 0, %s223
      %s238 = sphi 0, %s224
      %s244 = sphi 0, %s246
      %s247 = sphi 0, %s244
      %s248 = sphi 0, %s247
      %s264 = sphi 0, %s248
    $region4: #{tpu_custom_call.1} parent=1 // loop_header_branch
      %22 = sbr.rel (%p20) target = $region8
    $region5: #{tpu_custom_call.1} parent=1 // loop_body
      %s24 = ssub.s32 %s19, 1
      %s25 = ssub.s32 %s19, 2
      %s26 = sadd.s32 %s19, 1
      %s27 = ssub.s32 %s19, %s26
      %p28 = scmp.eq.s32.totalorder %s27, 0
      %s30 = sadd.s32 %s29, 1
      %s31 = scalar_select %p28, %s29, %s30
      %p34 = pneg %p28
      %p35 = scmp.eq.s32.totalorder %s19, 1
      %p36 = por %p34, %p35
      %p37 = scmp.ne.s32.totalorder %s29, %s32
      %p38 = scmp.eq.s32.totalorder %s19, 0
      %p39 = por %p37, %p38
      %p40 = scmp.ne.s32.totalorder %s29, %s32
      %p41 = scmp.eq.s32.totalorder %s24, 1
      %p42 = por %p40, %p41
      %p43 = scmp.ne.s32.totalorder %s32, %s33
      %p44 = scmp.eq.s32.totalorder %s24, 0
      %p45 = por %p43, %p44
      %p46 = scmp.ne.s32.totalorder %s32, %s33
      %p47 = scmp.eq.s32.totalorder %s25, 1
      %p48 = por %p46, %p47
      %p50 = scmp.ne.s32.totalorder %s33, %s49
      %p51 = scmp.eq.s32.totalorder %s25, 0
      %p52 = por %p50, %p51
      %s54 = sadd.s32 %s53, 1
      %p57 = scmp.eq.s32.totalorder %s19, 1
      %p58 = scmp.ne.s32.totalorder %s53, %s55
      %p59 = scmp.eq.s32.totalorder %s19, 0
      %p60 = por %p58, %p59
      %p61 = scmp.ne.s32.totalorder %s53, %s55
      %p62 = scmp.eq.s32.totalorder %s24, 1
      %p63 = por %p61, %p62
      %p64 = scmp.ne.s32.totalorder %s55, %s56
      %p65 = scmp.eq.s32.totalorder %s24, 0
      %p66 = por %p64, %p65
      %p67 = scmp.ne.s32.totalorder %s55, %s56
      %p68 = scmp.eq.s32.totalorder %s25, 1
      %p69 = por %p67, %p68
      %p71 = scmp.ne.s32.totalorder %s56, %s70
      %p72 = scmp.eq.s32.totalorder %s25, 0
      %p73 = por %p71, %p72
      %s75 = sadd.s32 %s74, 1
      %p78 = scmp.eq.s32.totalorder %s19, 1
      %p79 = scmp.ne.s32.totalorder %s74, %s76
      %p80 = scmp.eq.s32.totalorder %s19, 0
      %p81 = por %p79, %p80
      %p82 = scmp.ne.s32.totalorder %s74, %s76
      %p83 = scmp.eq.s32.totalorder %s24, 1
      %p84 = por %p82, %p83
      %p85 = scmp.ne.s32.totalorder %s76, %s77
      %p86 = scmp.eq.s32.totalorder %s24, 0
      %p87 = por %p85, %p86
      %p88 = scmp.ne.s32.totalorder %s76, %s77
      %p89 = scmp.eq.s32.totalorder %s25, 1
      %p90 = por %p88, %p89
      %p92 = scmp.ne.s32.totalorder %s77, %s91
      %p93 = scmp.eq.s32.totalorder %s25, 0
      %p94 = por %p92, %p93
      %s96 = sadd.s32 %s95, 1
      %p99 = scmp.eq.s32.totalorder %s19, 1
      %p100 = scmp.ne.s32.totalorder %s95, %s97
      %p101 = scmp.eq.s32.totalorder %s19, 0
      %p102 = por %p100, %p101
      %p103 = scmp.ne.s32.totalorder %s95, %s97
      %p104 = scmp.eq.s32.totalorder %s24, 1
      %p105 = por %p103, %p104
      %p106 = scmp.ne.s32.totalorder %s97, %s98
      %p107 = scmp.eq.s32.totalorder %s24, 0
      %p108 = por %p106, %p107
      %p109 = scmp.ne.s32.totalorder %s97, %s98
      %p110 = scmp.eq.s32.totalorder %s25, 1
      %p111 = por %p109, %p110
      %p113 = scmp.ne.s32.totalorder %s98, %s112
      %p114 = scmp.eq.s32.totalorder %s25, 0
      %p115 = por %p113, %p114
      %s117 = sadd.s32 %s116, 1
      %p120 = scmp.eq.s32.totalorder %s19, 1
      %p121 = scmp.ne.s32.totalorder %s116, %s118
      %p122 = scmp.eq.s32.totalorder %s19, 0
      %p123 = por %p121, %p122
      %p124 = scmp.ne.s32.totalorder %s116, %s118
      %p125 = scmp.eq.s32.totalorder %s24, 1
      %p126 = por %p124, %p125
      %p127 = scmp.ne.s32.totalorder %s118, %s119
      %p128 = scmp.eq.s32.totalorder %s24, 0
      %p129 = por %p127, %p128
      %p130 = scmp.ne.s32.totalorder %s118, %s119
      %p131 = scmp.eq.s32.totalorder %s25, 1
      %p132 = por %p130, %p131
      %p134 = scmp.ne.s32.totalorder %s119, %s133
      %p135 = scmp.eq.s32.totalorder %s25, 0
      %p136 = por %p134, %p135
      %s138 = sadd.s32 %s137, 1
      %p141 = scmp.eq.s32.totalorder %s19, 1
      %p142 = scmp.ne.s32.totalorder %s137, %s139
      %p143 = scmp.eq.s32.totalorder %s19, 0
      %p144 = por %p142, %p143
      %p145 = scmp.ne.s32.totalorder %s137, %s139
      %p146 = scmp.eq.s32.totalorder %s24, 1
      %p147 = por %p145, %p146
      %p148 = scmp.ne.s32.totalorder %s139, %s140
      %p149 = scmp.eq.s32.totalorder %s24, 0
      %p150 = por %p148, %p149
      %p151 = scmp.ne.s32.totalorder %s139, %s140
      %p152 = scmp.eq.s32.totalorder %s25, 1
      %p153 = por %p151, %p152
      %p155 = scmp.ne.s32.totalorder %s140, %s154
      %p156 = scmp.eq.s32.totalorder %s25, 0
      %p157 = por %p155, %p156
      %s159 = sadd.s32 %s158, 1
      %p162 = scmp.eq.s32.totalorder %s19, 1
      %p163 = scmp.ne.s32.totalorder %s158, %s160
      %p164 = scmp.eq.s32.totalorder %s19, 0
      %p165 = por %p163, %p164
      %p166 = scmp.ne.s32.totalorder %s158, %s160
      %p167 = scmp.eq.s32.totalorder %s24, 1
      %p168 = por %p166, %p167
      %p169 = scmp.ne.s32.totalorder %s160, %s161
      %p170 = scmp.eq.s32.totalorder %s24, 0
      %p171 = por %p169, %p170
      %p172 = scmp.ne.s32.totalorder %s160, %s161
      %p173 = scmp.eq.s32.totalorder %s25, 1
      %p174 = por %p172, %p173
      %p176 = scmp.ne.s32.totalorder %s161, %s175
      %p177 = scmp.eq.s32.totalorder %s25, 0
      %p178 = por %p176, %p177
      %s180 = sadd.s32 %s179, 1
      %p183 = scmp.eq.s32.totalorder %s19, 1
      %p184 = scmp.ne.s32.totalorder %s179, %s181
      %p185 = scmp.eq.s32.totalorder %s19, 0
      %p186 = por %p184, %p185
      %p187 = scmp.ne.s32.totalorder %s179, %s181
      %p188 = scmp.eq.s32.totalorder %s24, 1
      %p189 = por %p187, %p188
      %p190 = scmp.ne.s32.totalorder %s181, %s182
      %p191 = scmp.eq.s32.totalorder %s24, 0
      %p192 = por %p190, %p191
      %p193 = scmp.ne.s32.totalorder %s181, %s182
      %p194 = scmp.eq.s32.totalorder %s25, 1
      %p195 = por %p193, %p194
      %p197 = scmp.ne.s32.totalorder %s182, %s196
      %p198 = scmp.eq.s32.totalorder %s25, 0
      %p199 = por %p197, %p198
      %s201 = sadd.s32 %s200, 1
      %p204 = scmp.eq.s32.totalorder %s19, 1
      %p205 = scmp.ne.s32.totalorder %s200, %s202
      %p206 = scmp.eq.s32.totalorder %s19, 0
      %p207 = por %p205, %p206
      %p208 = scmp.ne.s32.totalorder %s200, %s202
      %p209 = scmp.eq.s32.totalorder %s24, 1
      %p210 = por %p208, %p209
      %p211 = scmp.ne.s32.totalorder %s202, %s203
      %p212 = scmp.eq.s32.totalorder %s24, 0
      %p213 = por %p211, %p212
      %p214 = scmp.ne.s32.totalorder %s202, %s203
      %p215 = scmp.eq.s32.totalorder %s25, 1
      %p216 = por %p214, %p215
      %p218 = scmp.ne.s32.totalorder %s203, %s217
      %p219 = scmp.eq.s32.totalorder %s25, 0
      %p220 = por %p218, %p219
      %s222 = sadd.s32 %s221, 1
      %p225 = scmp.eq.s32.totalorder %s19, 1
      %p226 = scmp.ne.s32.totalorder %s221, %s223
      %p227 = scmp.eq.s32.totalorder %s19, 0
      %p228 = por %p226, %p227
      %p229 = scmp.ne.s32.totalorder %s221, %s223
      %p230 = scmp.eq.s32.totalorder %s24, 1
      %p231 = por %p229, %p230
      %p232 = scmp.ne.s32.totalorder %s223, %s224
      %p233 = scmp.eq.s32.totalorder %s24, 0
      %p234 = por %p232, %p233
      %p235 = scmp.ne.s32.totalorder %s223, %s224
      %p236 = scmp.eq.s32.totalorder %s25, 1
      %p237 = por %p235, %p236
      %p239 = scmp.ne.s32.totalorder %s224, %s238
      %p240 = scmp.eq.s32.totalorder %s25, 0
      %p241 = por %p239, %p240
      %s242 = ssub.s32 %s19, %s26
      %p243 = scmp.eq.s32.totalorder %s242, 0
      %s245 = sadd.s32 %s244, 1
      %s246 = scalar_select %p243, %s244, %s245
      %p249 = pneg %p243
      %p250 = scmp.eq.s32.totalorder %s19, 1
      %p251 = por %p249, %p250
      %p252 = scmp.ne.s32.totalorder %s244, %s247
      %p253 = scmp.eq.s32.totalorder %s19, 0
      %p254 = por %p252, %p253
      %p255 = scmp.ne.s32.totalorder %s244, %s247
      %p256 = scmp.eq.s32.totalorder %s24, 1
      %p257 = por %p255, %p256
      %p258 = scmp.ne.s32.totalorder %s247, %s248
      %p259 = scmp.eq.s32.totalorder %s24, 0
      %p260 = por %p258, %p259
      %p261 = scmp.ne.s32.totalorder %s247, %s248
      %p262 = scmp.eq.s32.totalorder %s25, 1
      %p263 = por %p261, %p262
      %p265 = scmp.ne.s32.totalorder %s248, %s264
      %p266 = scmp.eq.s32.totalorder %s25, 0
      %p267 = por %p265, %p266
      %p268 = scmp.le.s32.totalorder 1, %s19
      %p269 = scmp.lt.s32.totalorder %s19, 3
      %p270 = pnand %p268, %p269
      %p271 = pneg %p270
      // Predicated region
      $region9: #{tpu_custom_call.1} parent=5 // pred_check
        _
      $region10: #{tpu_custom_call.1} parent=5 // pred_check_branch
        %273 = sbr.rel (%p270) target = $region12
      $region11: #{tpu_custom_call.1} parent=5 // pred_region
        %s274 = ssub.s32 %s19, 1
        // Predicated region
        $region13: #{tpu_custom_call.1} parent=11 // pred_check
          %p275 = pneg %p66
        $region14: #{tpu_custom_call.1} parent=11 // pred_check_branch
          %277 = sbr.rel (%p275) target = $region16
        $region15: #{tpu_custom_call.1} parent=11 // pred_region
          _
        $region16: #{tpu_custom_call.1} parent=11 // pred_fallthru
          _
        // Predicated region
        $region17: #{tpu_custom_call.1} parent=11 // pred_check
          %p278 = pneg %p87
        $region18: #{tpu_custom_call.1} parent=11 // pred_check_branch
          %280 = sbr.rel (%p278) target = $region20
        $region19: #{tpu_custom_call.1} parent=11 // pred_region
          _
        $region20: #{tpu_custom_call.1} parent=11 // pred_fallthru
          _
        // Predicated region
        $region21: #{tpu_custom_call.1} parent=11 // pred_check
          %p281 = pneg %p108
        $region22: #{tpu_custom_call.1} parent=11 // pred_check_branch
          %283 = sbr.rel (%p281) target = $region24
        $region23: #{tpu_custom_call.1} parent=11 // pred_region
          _
        $region24: #{tpu_custom_call.1} parent=11 // pred_fallthru
          _
        // Predicated region
        $region25: #{tpu_custom_call.1} parent=11 // pred_check
          %p284 = pneg %p129
        $region26: #{tpu_custom_call.1} parent=11 // pred_check_branch
          %286 = sbr.rel (%p284) target = $region28
        $region27: #{tpu_custom_call.1} parent=11 // pred_region
          _
        $region28: #{tpu_custom_call.1} parent=11 // pred_fallthru
          _
        // Predicated region
        $region29: #{tpu_custom_call.1} parent=11 // pred_check
          %p287 = pneg %p150
        $region30: #{tpu_custom_call.1} parent=11 // pred_check_branch
          %289 = sbr.rel (%p287) target = $region32
        $region31: #{tpu_custom_call.1} parent=11 // pred_region
          _
        $region32: #{tpu_custom_call.1} parent=11 // pred_fallthru
          _
        // Predicated region
        $region33: #{tpu_custom_call.1} parent=11 // pred_check
          %p290 = pneg %p171
        $region34: #{tpu_custom_call.1} parent=11 // pred_check_branch
          %292 = sbr.rel (%p290) target = $region36
        $region35: #{tpu_custom_call.1} parent=11 // pred_region
          _
        $region36: #{tpu_custom_call.1} parent=11 // pred_fallthru
          _
        // Predicated region
        $region37: #{tpu_custom_call.1} parent=11 // pred_check
          %p293 = pneg %p192
        $region38: #{tpu_custom_call.1} parent=11 // pred_check_branch
          %295 = sbr.rel (%p293) target = $region40
        $region39: #{tpu_custom_call.1} parent=11 // pred_region
          _
        $region40: #{tpu_custom_call.1} parent=11 // pred_fallthru
          _
        // Predicated region
        $region41: #{tpu_custom_call.1} parent=11 // pred_check
          %p296 = pneg %p213
        $region42: #{tpu_custom_call.1} parent=11 // pred_check_branch
          %298 = sbr.rel (%p296) target = $region44
        $region43: #{tpu_custom_call.1} parent=11 // pred_region
          _
        $region44: #{tpu_custom_call.1} parent=11 // pred_fallthru
          _
        // Predicated region
        $region45: #{tpu_custom_call.1} parent=11 // pred_check
          %p299 = pneg %p234
        $region46: #{tpu_custom_call.1} parent=11 // pred_check_branch
          %301 = sbr.rel (%p299) target = $region48
        $region47: #{tpu_custom_call.1} parent=11 // pred_region
          _
        $region48: #{tpu_custom_call.1} parent=11 // pred_fallthru
          _
      $region12: #{tpu_custom_call.1} parent=5 // pred_fallthru
        _
      %p302 = scmp.lt.s32.totalorder %s19, 2
      // Predicated region
      $region49: #{tpu_custom_call.1} parent=5 // pred_check
        %p303 = pneg %p302
      $region50: #{tpu_custom_call.1} parent=5 // pred_check_branch
        %305 = sbr.rel (%p303) target = $region52
      $region51: #{tpu_custom_call.1} parent=5 // pred_region
        // Predicated region
        $region53: #{tpu_custom_call.1} parent=51 // pred_check
          %p306 = pneg %p39
        $region54: #{tpu_custom_call.1} parent=51 // pred_check_branch
          %308 = sbr.rel (%p306) target = $region56
        $region55: #{tpu_custom_call.1} parent=51 // pred_region
          %s309 = smul.u32 8, %s19
          %p310 = scmp.lt.s32.totalorder %s309, 15
          %s311 = scalar_select %p310, %s309, 15
          %s312 = smul.addr %s311, 4
          %s313 = smul.addr %s312, 4
          %s314 = scalar_lea.vmem %s0, %s313
          %s315 = smul.u32 8, %s19
        $region56: #{tpu_custom_call.1} parent=51 // pred_fallthru
          _
      $region52: #{tpu_custom_call.1} parent=5 // pred_fallthru
        _
      %p316 = scmp.le.s32.totalorder 1, %s19
      %p317 = scmp.lt.s32.totalorder %s19, 3
      %p318 = pnand %p316, %p317
      %p319 = pneg %p318
      // Predicated region
      $region57: #{tpu_custom_call.1} parent=5 // pred_check
        _
      $region58: #{tpu_custom_call.1} parent=5 // pred_check_branch
        %321 = sbr.rel (%p318) target = $region60
      $region59: #{tpu_custom_call.1} parent=5 // pred_region
        %s322 = ssub.s32 %s19, 1
        %s323 = smul.u32 8, %s24
        %p324 = scmp.lt.s32.totalorder %s323, 15
        %s325 = scalar_select %p324, %s323, 15
        %s326 = smul.addr %s325, 4
        %s327 = smul.addr %s326, 4
        %s328 = scalar_lea.vmem %s0, %s327
        %p329 = pneg %p45
        %p330 = pneg %p42
        %p331 = pneg %p66
        %p332 = pneg %p63
        %p333 = pneg %p87
        %p334 = pneg %p84
        %p335 = pneg %p108
        %p336 = pneg %p105
        %p337 = pneg %p129
        %p338 = pneg %p126
        %p339 = pneg %p150
        %p340 = pneg %p147
        %p341 = pneg %p171
        %p342 = pneg %p168
        %p343 = pneg %p192
        %p344 = pneg %p189
        %p345 = pneg %p213
        %p346 = pneg %p210
        %p347 = pneg %p234
        %p348 = pneg %p231
        %p349 = pneg %p260
        %p350 = pneg %p257
        %s351 = sand.u32 %s247, 1
        %s352 = scalar_lea.sflag [#allocation3], %s351
        %s353 = sand.u32 %s247, 1
        %s354 = smul.addr %s353, 128
        %s355 = scalar_lea.vmem [#allocation2], %s354
        %s356 = smul.u32 8, %s24
        %p357 = scmp.lt.s32.totalorder %s356, 15
        %s358 = scalar_select %p357, %s356, 15
        %s359 = smul.addr %s358, 4
        %s360 = smul.addr %s359, 4
        %s361 = scalar_lea.vmem %s0, %s360
        %s362 = smul.u32 8, %s24
        %s363 = smul.u32 4, %s24
        %v365 = vld [vmem:[%s361] sm:$0xff]
        %v366 = vld [vmem:[%s361 + $0x8] sm:$0xff]
        %v367 = vld [vmem:[%s361 + $0x10] sm:$0xff]
        %v368 = vld [vmem:[%s361 + $0x18] sm:$0xff]
        %v369 = vld [vmem:[%s361 + $0x20] sm:$0xff]
        %v370 = vld [vmem:[%s361 + $0x28] sm:$0xff]
        %v371 = vld [vmem:[%s361 + $0x30] sm:$0xff]
        %v372 = vld [vmem:[%s361 + $0x38] sm:$0xff]
        %v373 = vld [vmem:[%s361 + $0x40] sm:$0xff]
        %v374 = vld [vmem:[%s361 + $0x48] sm:$0xff]
        %v375 = vld [vmem:[%s361 + $0x50] sm:$0xff]
        %v376 = vld [vmem:[%s361 + $0x58] sm:$0xff]
        %v377 = vld [vmem:[%s361 + $0x60] sm:$0xff]
        %v378 = vld [vmem:[%s361 + $0x68] sm:$0xff]
        %v379 = vld [vmem:[%s361 + $0x70] sm:$0xff]
        %v380 = vld [vmem:[%s361 + $0x78] sm:$0xff]
        %v381 = vld [vmem:[%s1] sm:$0xf]
        %v382 = vld [vmem:[%s1 + $0x4] sm:$0xf]
        %v383 = vld [vmem:[%s1 + $0x8] sm:$0xf]
        %v384 = vld [vmem:[%s1 + $0xc] sm:$0xf]
        %v385 = vld [vmem:[%s1 + $0x10] sm:$0xf]
        %v386 = vld [vmem:[%s1 + $0x14] sm:$0xf]
        %v387 = vld [vmem:[%s1 + $0x18] sm:$0xf]
        %v388 = vld [vmem:[%s1 + $0x1c] sm:$0xf]
        %v389 = vld [vmem:[%s1 + $0x20] sm:$0xf]
        %v390 = vld [vmem:[%s1 + $0x24] sm:$0xf]
        %v391 = vld [vmem:[%s1 + $0x28] sm:$0xf]
        %v392 = vld [vmem:[%s1 + $0x2c] sm:$0xf]
        %v393 = vld [vmem:[%s1 + $0x30] sm:$0xf]
        %v394 = vld [vmem:[%s1 + $0x34] sm:$0xf]
        %v395 = vld [vmem:[%s1 + $0x38] sm:$0xf]
        %v396 = vld [vmem:[%s1 + $0x3c] sm:$0xf]
        %v397 = vld [vmem:[%s1 + $0x40] sm:$0xf]
        %v398 = vld [vmem:[%s1 + $0x44] sm:$0xf]
        %v399 = vld [vmem:[%s1 + $0x48] sm:$0xf]
        %v400 = vld [vmem:[%s1 + $0x4c] sm:$0xf]
        %v401 = vld [vmem:[%s1 + $0x50] sm:$0xf]
        %v402 = vld [vmem:[%s1 + $0x54] sm:$0xf]
        %v403 = vld [vmem:[%s1 + $0x58] sm:$0xf]
        %v404 = vld [vmem:[%s1 + $0x5c] sm:$0xf]
        %v405 = vld [vmem:[%s1 + $0x60] sm:$0xf]
        %v406 = vld [vmem:[%s1 + $0x64] sm:$0xf]
        %v407 = vld [vmem:[%s1 + $0x68] sm:$0xf]
        %v408 = vld [vmem:[%s1 + $0x6c] sm:$0xf]
        %v409 = vld [vmem:[%s1 + $0x70] sm:$0xf]
        %v410 = vld [vmem:[%s1 + $0x74] sm:$0xf]
        %v411 = vld [vmem:[%s1 + $0x78] sm:$0xf]
        %v412 = vld [vmem:[%s1 + $0x7c] sm:$0xf]
        %v413 = vld [vmem:[%s1 + $0x80] sm:$0xf]
        %v414 = vld [vmem:[%s1 + $0x84] sm:$0xf]
        %v415 = vld [vmem:[%s1 + $0x88] sm:$0xf]
        %v416 = vld [vmem:[%s1 + $0x8c] sm:$0xf]
        %v417 = vld [vmem:[%s1 + $0x90] sm:$0xf]
        %v418 = vld [vmem:[%s1 + $0x94] sm:$0xf]
        %v419 = vld [vmem:[%s1 + $0x98] sm:$0xf]
        %v420 = vld [vmem:[%s1 + $0x9c] sm:$0xf]
        %v421 = vld [vmem:[%s1 + $0xa0] sm:$0xf]
        %v422 = vld [vmem:[%s1 + $0xa4] sm:$0xf]
        %v423 = vld [vmem:[%s1 + $0xa8] sm:$0xf]
        %v424 = vld [vmem:[%s1 + $0xac] sm:$0xf]
        %v425 = vld [vmem:[%s1 + $0xb0] sm:$0xf]
        %v426 = vld [vmem:[%s1 + $0xb4] sm:$0xf]
        %v427 = vld [vmem:[%s1 + $0xb8] sm:$0xf]
        %v428 = vld [vmem:[%s1 + $0xbc] sm:$0xf]
        %v429 = vld [vmem:[%s1 + $0xc0] sm:$0xf]
        %v430 = vld [vmem:[%s1 + $0xc4] sm:$0xf]
        %v431 = vld [vmem:[%s1 + $0xc8] sm:$0xf]
        %v432 = vld [vmem:[%s1 + $0xcc] sm:$0xf]
        %v433 = vld [vmem:[%s1 + $0xd0] sm:$0xf]
        %v434 = vld [vmem:[%s1 + $0xd4] sm:$0xf]
        %v435 = vld [vmem:[%s1 + $0xd8] sm:$0xf]
        %v436 = vld [vmem:[%s1 + $0xdc] sm:$0xf]
        %v437 = vld [vmem:[%s1 + $0xe0] sm:$0xf]
        %v438 = vld [vmem:[%s1 + $0xe4] sm:$0xf]
        %v439 = vld [vmem:[%s1 + $0xe8] sm:$0xf]
        %v440 = vld [vmem:[%s1 + $0xec] sm:$0xf]
        %v441 = vld [vmem:[%s1 + $0xf0] sm:$0xf]
        %v442 = vld [vmem:[%s1 + $0xf4] sm:$0xf]
        %v443 = vld [vmem:[%s1 + $0xf8] sm:$0xf]
        %v444 = vld [vmem:[%s1 + $0xfc] sm:$0xf]
        %v461 = vunpack.c.l.b16 %v365
        %v462 = vunpack.c.h.b16 %v365
        %v463 = vunpack.c.l.b16 %v366
        %v464 = vunpack.c.h.b16 %v366
        %v465 = vunpack.c.l.b16 %v367
        %v466 = vunpack.c.h.b16 %v367
        %v467 = vunpack.c.l.b16 %v368
        %v468 = vunpack.c.h.b16 %v368
        %v469 = vunpack.c.l.b16 %v369
        %v470 = vunpack.c.h.b16 %v369
        %v471 = vunpack.c.l.b16 %v370
        %v472 = vunpack.c.h.b16 %v370
        %v473 = vunpack.c.l.b16 %v371
        %v474 = vunpack.c.h.b16 %v371
        %v475 = vunpack.c.l.b16 %v372
        %v476 = vunpack.c.h.b16 %v372
        %v477 = vunpack.c.l.b16 %v373
        %v478 = vunpack.c.h.b16 %v373
        %v479 = vunpack.c.l.b16 %v374
        %v480 = vunpack.c.h.b16 %v374
        %v481 = vunpack.c.l.b16 %v375
        %v482 = vunpack.c.h.b16 %v375
        %v483 = vunpack.c.l.b16 %v376
        %v484 = vunpack.c.h.b16 %v376
        %v485 = vunpack.c.l.b16 %v377
        %v486 = vunpack.c.h.b16 %v377
        %v487 = vunpack.c.l.b16 %v378
        %v488 = vunpack.c.h.b16 %v378
        %v489 = vunpack.c.l.b16 %v379
        %v490 = vunpack.c.h.b16 %v379
        %v491 = vunpack.c.l.b16 %v380
        %v492 = vunpack.c.h.b16 %v380
        %v493 = vpack.c.b16 %v465, %v461
        %v494 = vpack.c.b16 %v466, %v462
        %v495 = vpack.c.b16 %v467, %v463
        %v496 = vpack.c.b16 %v468, %v464
        %v497 = vpack.c.b16 %v473, %v469
        %v498 = vpack.c.b16 %v474, %v470
        %v499 = vpack.c.b16 %v475, %v471
        %v500 = vpack.c.b16 %v476, %v472
        %v501 = vpack.c.b16 %v481, %v477
        %v502 = vpack.c.b16 %v482, %v478
        %v503 = vpack.c.b16 %v483, %v479
        %v504 = vpack.c.b16 %v484, %v480
        %v505 = vpack.c.b16 %v489, %v485
        %v506 = vpack.c.b16 %v490, %v486
        %v507 = vpack.c.b16 %v491, %v487
        %v508 = vpack.c.b16 %v492, %v488
        %v589 = vunpack.c.l.b16 %v381
        %v590 = vunpack.c.l.b16 %v382
        %v591 = vunpack.c.l.b16 %v383
        %v592 = vunpack.c.l.b16 %v384
        %v593 = vunpack.c.l.b16 %v385
        %v594 = vunpack.c.l.b16 %v386
        %v595 = vunpack.c.l.b16 %v387
        %v596 = vunpack.c.l.b16 %v388
        %v597 = vunpack.c.l.b16 %v389
        %v598 = vunpack.c.l.b16 %v390
        %v599 = vunpack.c.l.b16 %v391
        %v600 = vunpack.c.l.b16 %v392
        %v601 = vunpack.c.l.b16 %v393
        %v602 = vunpack.c.l.b16 %v394
        %v603 = vunpack.c.l.b16 %v395
        %v604 = vunpack.c.l.b16 %v396
        %v605 = vunpack.c.l.b16 %v397
        %v606 = vunpack.c.l.b16 %v398
        %v607 = vunpack.c.l.b16 %v399
        %v608 = vunpack.c.l.b16 %v400
        %v609 = vunpack.c.l.b16 %v401
        %v610 = vunpack.c.l.b16 %v402
        %v611 = vunpack.c.l.b16 %v403
        %v612 = vunpack.c.l.b16 %v404
        %v613 = vunpack.c.l.b16 %v405
        %v614 = vunpack.c.l.b16 %v406
        %v615 = vunpack.c.l.b16 %v407
        %v616 = vunpack.c.l.b16 %v408
        %v617 = vunpack.c.l.b16 %v409
        %v618 = vunpack.c.l.b16 %v410
        %v619 = vunpack.c.l.b16 %v411
        %v620 = vunpack.c.l.b16 %v412
        %v621 = vunpack.c.l.b16 %v413
        %v622 = vunpack.c.l.b16 %v414
        %v623 = vunpack.c.l.b16 %v415
        %v624 = vunpack.c.l.b16 %v416
        %v625 = vunpack.c.l.b16 %v417
        %v626 = vunpack.c.l.b16 %v418
        %v627 = vunpack.c.l.b16 %v419
        %v628 = vunpack.c.l.b16 %v420
        %v629 = vunpack.c.l.b16 %v421
        %v630 = vunpack.c.l.b16 %v422
        %v631 = vunpack.c.l.b16 %v423
        %v632 = vunpack.c.l.b16 %v424
        %v633 = vunpack.c.l.b16 %v425
        %v634 = vunpack.c.l.b16 %v426
        %v635 = vunpack.c.l.b16 %v427
        %v636 = vunpack.c.l.b16 %v428
        %v637 = vunpack.c.l.b16 %v429
        %v638 = vunpack.c.l.b16 %v430
        %v639 = vunpack.c.l.b16 %v431
        %v640 = vunpack.c.l.b16 %v432
        %v641 = vunpack.c.l.b16 %v433
        %v642 = vunpack.c.l.b16 %v434
        %v643 = vunpack.c.l.b16 %v435
        %v644 = vunpack.c.l.b16 %v436
        %v645 = vunpack.c.l.b16 %v437
        %v646 = vunpack.c.l.b16 %v438
        %v647 = vunpack.c.l.b16 %v439
        %v648 = vunpack.c.l.b16 %v440
        %v649 = vunpack.c.l.b16 %v441
        %v650 = vunpack.c.l.b16 %v442
        %v651 = vunpack.c.l.b16 %v443
        %v652 = vunpack.c.l.b16 %v444
        %v653 = vpack.c.b16 %v590, %v589
        %v654 = vpack.c.b16 %v592, %v591
        %v655 = vpack.c.b16 %v594, %v593
        %v656 = vpack.c.b16 %v596, %v595
        %v657 = vpack.c.b16 %v598, %v597
        %v658 = vpack.c.b16 %v600, %v599
        %v659 = vpack.c.b16 %v602, %v601
        %v660 = vpack.c.b16 %v604, %v603
        %v661 = vpack.c.b16 %v606, %v605
        %v662 = vpack.c.b16 %v608, %v607
        %v663 = vpack.c.b16 %v610, %v609
        %v664 = vpack.c.b16 %v612, %v611
        %v665 = vpack.c.b16 %v614, %v613
        %v666 = vpack.c.b16 %v616, %v615
        %v667 = vpack.c.b16 %v618, %v617
        %v668 = vpack.c.b16 %v620, %v619
        %v669 = vpack.c.b16 %v622, %v621
        %v670 = vpack.c.b16 %v624, %v623
        %v671 = vpack.c.b16 %v626, %v625
        %v672 = vpack.c.b16 %v628, %v627
        %v673 = vpack.c.b16 %v630, %v629
        %v674 = vpack.c.b16 %v632, %v631
        %v675 = vpack.c.b16 %v634, %v633
        %v676 = vpack.c.b16 %v636, %v635
        %v677 = vpack.c.b16 %v638, %v637
        %v678 = vpack.c.b16 %v640, %v639
        %v679 = vpack.c.b16 %v642, %v641
        %v680 = vpack.c.b16 %v644, %v643
        %v681 = vpack.c.b16 %v646, %v645
        %v682 = vpack.c.b16 %v648, %v647
        %v683 = vpack.c.b16 %v650, %v649
        %v684 = vpack.c.b16 %v652, %v651
        %717 = vmatpush.bf16.msra.mxu0 %v660
        %718 = vmatpush.bf16.msra.mxu0 %v659
        %719 = vmatpush.bf16.msra.mxu0 %v658
        %720 = vmatpush.bf16.msra.mxu0 %v657
        %721 = vmatpush.bf16.msra.mxu0 %v656
        %722 = vmatpush.bf16.msra.mxu0 %v655
        %723 = vmatpush.bf16.msra.mxu0 %v654
        %724 = vmatpush.bf16.msra.mxu0 %v653
        %725 = vmatmul.bf16.gmra.mxu0 %v493
        %v726 = vpop.f32.mrf.mxu0
        %v727 = vadd.f32 0.0, %v726
        %v728 = vpop.f32.mrf.mxu0
        %v729 = vadd.f32 0.0, %v728
        %730 = vmatmul.bf16.gmra.mxu0 %v497
        %v731 = vpop.f32.mrf.mxu0
        %v732 = vadd.f32 0.0, %v731
        %v733 = vpop.f32.mrf.mxu0
        %v734 = vadd.f32 0.0, %v733
        %735 = vmatmul.bf16.gmra.mxu0 %v501
        %v736 = vpop.f32.mrf.mxu0
        %v737 = vadd.f32 0.0, %v736
        %v738 = vpop.f32.mrf.mxu0
        %v739 = vadd.f32 0.0, %v738
        %740 = vmatmul.bf16.gmra.mxu0 %v505
        %v741 = vpop.f32.mrf.mxu0
        %v742 = vadd.f32 0.0, %v741
        %v743 = vpop.f32.mrf.mxu0
        %v744 = vadd.f32 0.0, %v743
        %745 = vdwg.mxu0
        %746 = vmatpush.bf16.msra.mxu0 %v668
        %747 = vmatpush.bf16.msra.mxu0 %v667
        %748 = vmatpush.bf16.msra.mxu0 %v666
        %749 = vmatpush.bf16.msra.mxu0 %v665
        %750 = vmatpush.bf16.msra.mxu0 %v664
        %751 = vmatpush.bf16.msra.mxu0 %v663
        %752 = vmatpush.bf16.msra.mxu0 %v662
        %753 = vmatpush.bf16.msra.mxu0 %v661
        %754 = vmatmul.bf16.gmra.mxu0 %v494
        %v755 = vpop.f32.mrf.mxu0
        %v756 = vadd.f32 %v727, %v755
        %v757 = vpop.f32.mrf.mxu0
        %v758 = vadd.f32 %v729, %v757
        %759 = vmatmul.bf16.gmra.mxu0 %v498
        %v760 = vpop.f32.mrf.mxu0
        %v761 = vadd.f32 %v732, %v760
        %v762 = vpop.f32.mrf.mxu0
        %v763 = vadd.f32 %v734, %v762
        %764 = vmatmul.bf16.gmra.mxu0 %v502
        %v765 = vpop.f32.mrf.mxu0
        %v766 = vadd.f32 %v737, %v765
        %v767 = vpop.f32.mrf.mxu0
        %v768 = vadd.f32 %v739, %v767
        %769 = vmatmul.bf16.gmra.mxu0 %v506
        %v770 = vpop.f32.mrf.mxu0
        %v771 = vadd.f32 %v742, %v770
        %v772 = vpop.f32.mrf.mxu0
        %v773 = vadd.f32 %v744, %v772
        %774 = vdwg.mxu0
        %775 = vmatpush.bf16.msra.mxu0 %v676
        %776 = vmatpush.bf16.msra.mxu0 %v675
        %777 = vmatpush.bf16.msra.mxu0 %v674
        %778 = vmatpush.bf16.msra.mxu0 %v673
        %779 = vmatpush.bf16.msra.mxu0 %v672
        %780 = vmatpush.bf16.msra.mxu0 %v671
        %781 = vmatpush.bf16.msra.mxu0 %v670
        %782 = vmatpush.bf16.msra.mxu0 %v669
        %783 = vmatmul.bf16.gmra.mxu0 %v495
        %v784 = vpop.f32.mrf.mxu0
        %v785 = vadd.f32 %v756, %v784
        %v786 = vpop.f32.mrf.mxu0
        %v787 = vadd.f32 %v758, %v786
        %788 = vmatmul.bf16.gmra.mxu0 %v499
        %v789 = vpop.f32.mrf.mxu0
        %v790 = vadd.f32 %v761, %v789
        %v791 = vpop.f32.mrf.mxu0
        %v792 = vadd.f32 %v763, %v791
        %793 = vmatmul.bf16.gmra.mxu0 %v503
        %v794 = vpop.f32.mrf.mxu0
        %v795 = vadd.f32 %v766, %v794
        %v796 = vpop.f32.mrf.mxu0
        %v797 = vadd.f32 %v768, %v796
        %798 = vmatmul.bf16.gmra.mxu0 %v507
        %v799 = vpop.f32.mrf.mxu0
        %v800 = vadd.f32 %v771, %v799
        %v801 = vpop.f32.mrf.mxu0
        %v802 = vadd.f32 %v773, %v801
        %803 = vdwg.mxu0
        %804 = vmatpush.bf16.msra.mxu0 %v684
        %805 = vmatpush.bf16.msra.mxu0 %v683
        %806 = vmatpush.bf16.msra.mxu0 %v682
        %807 = vmatpush.bf16.msra.mxu0 %v681
        %808 = vmatpush.bf16.msra.mxu0 %v680
        %809 = vmatpush.bf16.msra.mxu0 %v679
        %810 = vmatpush.bf16.msra.mxu0 %v678
        %811 = vmatpush.bf16.msra.mxu0 %v677
        %812 = vmatmul.bf16.gmra.mxu0 %v496
        %v813 = vpop.f32.mrf.mxu0
        %v814 = vadd.f32 %v785, %v813
        %v815 = vpop.f32.mrf.mxu0
        %v816 = vadd.f32 %v787, %v815
        %817 = vmatmul.bf16.gmra.mxu0 %v500
        %v818 = vpop.f32.mrf.mxu0
        %v819 = vadd.f32 %v790, %v818
        %v820 = vpop.f32.mrf.mxu0
        %v821 = vadd.f32 %v792, %v820
        %822 = vmatmul.bf16.gmra.mxu0 %v504
        %v823 = vpop.f32.mrf.mxu0
        %v824 = vadd.f32 %v795, %v823
        %v825 = vpop.f32.mrf.mxu0
        %v826 = vadd.f32 %v797, %v825
        %827 = vmatmul.bf16.gmra.mxu0 %v508
        %v828 = vpop.f32.mrf.mxu0
        %v829 = vadd.f32 %v800, %v828
        %v830 = vpop.f32.mrf.mxu0
        %v831 = vadd.f32 %v802, %v830
        %832 = vdwg.mxu0
        %v833 = vld [vmem:[%s3] sm:$0x1]
        %v834 = vld [vmem:[%s4] sm:$0xff]
        %v835 = vld [vmem:[%s4 + $0x8] sm:$0xff]
        %v836 = vld [vmem:[%s4 + $0x10] sm:$0xff]
        %v837 = vld [vmem:[%s4 + $0x18] sm:$0xff]
        %v838 = vld [vmem:[%s4 + $0x20] sm:$0xff]
        %v839 = vld [vmem:[%s4 + $0x28] sm:$0xff]
        %v840 = vld [vmem:[%s4 + $0x30] sm:$0xff]
        %v841 = vld [vmem:[%s4 + $0x38] sm:$0xff]
        %v842 = vld [vmem:[%s4 + $0x40] sm:$0xff]
        %v843 = vld [vmem:[%s4 + $0x48] sm:$0xff]
        %v844 = vld [vmem:[%s4 + $0x50] sm:$0xff]
        %v845 = vld [vmem:[%s4 + $0x58] sm:$0xff]
        %v846 = vld [vmem:[%s5] sm:$0xff]
        %v847 = vld [vmem:[%s5 + $0x8] sm:$0xff]
        %v848 = vld [vmem:[%s5 + $0x10] sm:$0xff]
        %v849 = vld [vmem:[%s5 + $0x18] sm:$0xff]
        %v850 = vld [vmem:[%s5 + $0x20] sm:$0xff]
        %v851 = vld [vmem:[%s5 + $0x28] sm:$0xff]
        %v852 = vld [vmem:[%s5 + $0x30] sm:$0xff]
        %v853 = vld [vmem:[%s5 + $0x38] sm:$0xff]
        %v854 = vld [vmem:[%s5 + $0x40] sm:$0xff]
        %v855 = vld [vmem:[%s5 + $0x48] sm:$0xff]
        %v856 = vld [vmem:[%s5 + $0x50] sm:$0xff]
        %v857 = vld [vmem:[%s5 + $0x58] sm:$0xff]
        %v858 = vld [vmem:[%s6] sm:$0xff]
        %v859 = vld [vmem:[%s6 + $0x8] sm:$0xff]
        %v860 = vld [vmem:[%s6 + $0x10] sm:$0xff]
        %v861 = vld [vmem:[%s6 + $0x18] sm:$0xff]
        %v862 = vld [vmem:[%s6 + $0x20] sm:$0xff]
        %v863 = vld [vmem:[%s6 + $0x28] sm:$0xff]
        %v864 = vld [vmem:[%s6 + $0x30] sm:$0xff]
        %v865 = vld [vmem:[%s6 + $0x38] sm:$0xff]
        %v866 = vld [vmem:[%s6 + $0x40] sm:$0xff]
        %v867 = vld [vmem:[%s6 + $0x48] sm:$0xff]
        %v868 = vld [vmem:[%s6 + $0x50] sm:$0xff]
        %v869 = vld [vmem:[%s6 + $0x58] sm:$0xff]
        %v870 = vld [vmem:[%s7] sm:$0xff]
        %v871 = vld [vmem:[%s7 + $0x8] sm:$0xff]
        %v872 = vld [vmem:[%s7 + $0x10] sm:$0xff]
        %v873 = vld [vmem:[%s7 + $0x18] sm:$0xff]
        %v874 = vld [vmem:[%s7 + $0x20] sm:$0xff]
        %v875 = vld [vmem:[%s7 + $0x28] sm:$0xff]
        %v876 = vld [vmem:[%s7 + $0x30] sm:$0xff]
        %v877 = vld [vmem:[%s7 + $0x38] sm:$0xff]
        %v878 = vld [vmem:[%s7 + $0x40] sm:$0xff]
        %v879 = vld [vmem:[%s7 + $0x48] sm:$0xff]
        %v880 = vld [vmem:[%s7 + $0x50] sm:$0xff]
        %v881 = vld [vmem:[%s7 + $0x58] sm:$0xff]
        %v882 = vld [vmem:[%s8] sm:$0xff]
        %v883 = vld [vmem:[%s8 + $0x8] sm:$0xff]
        %v884 = vld [vmem:[%s8 + $0x10] sm:$0xff]
        %v885 = vld [vmem:[%s8 + $0x18] sm:$0xff]
        %v886 = vld [vmem:[%s8 + $0x20] sm:$0xff]
        %v887 = vld [vmem:[%s8 + $0x28] sm:$0xff]
        %v888 = vld [vmem:[%s8 + $0x30] sm:$0xff]
        %v889 = vld [vmem:[%s8 + $0x38] sm:$0xff]
        %v890 = vld [vmem:[%s8 + $0x40] sm:$0xff]
        %v891 = vld [vmem:[%s8 + $0x48] sm:$0xff]
        %v892 = vld [vmem:[%s8 + $0x50] sm:$0xff]
        %v893 = vld [vmem:[%s8 + $0x58] sm:$0xff]
        %v894 = vld [vmem:[%s9] sm:$0xf]
        %v895 = vld [vmem:[%s9 + $0x4] sm:$0xf]
        %v896 = vmul.f32 %v814, %v834
        %v897 = vmul.f32 %v816, %v835
        %v898 = vmul.f32 %v819, %v836
        %v899 = vmul.f32 %v821, %v837
        %v900 = vmul.f32 %v814, %v838
        %v901 = vmul.f32 %v816, %v839
        %v902 = vmul.f32 %v819, %v840
        %v903 = vmul.f32 %v821, %v841
        %v904 = vmul.f32 %v814, %v842
        %v905 = vmul.f32 %v816, %v843
        %v906 = vmul.f32 %v819, %v844
        %v907 = vmul.f32 %v821, %v845
        %v909 = vperm.slane %v833, 0
        %v911 = vmul.f32 %v896, %v909
        %v912 = vmul.f32 %v897, %v909
        %v913 = vmul.f32 %v898, %v909
        %v914 = vmul.f32 %v899, %v909
        %v915 = vmul.f32 %v900, %v909
        %v916 = vmul.f32 %v901, %v909
        %v917 = vmul.f32 %v902, %v909
        %v918 = vmul.f32 %v903, %v909
        %v919 = vmul.f32 %v904, %v909
        %v920 = vmul.f32 %v905, %v909
        %v921 = vmul.f32 %v906, %v909
        %v922 = vmul.f32 %v907, %v909
        %vm923 = vcmask 457728
        %v924 = vsel %vm923, %v911, 0.0
        %925 = vadd.xlane.f32.xlu0 %v924
        %v926 = vpop.xlane.xlu0 %925
        %v927 = vsel %vm923, %v912, 0.0
        %928 = vadd.xlane.f32.xlu0 %v927
        %v929 = vpop.xlane.xlu0 %928
        %v930 = vsel %vm923, %v913, 0.0
        %931 = vadd.xlane.f32.xlu0 %v930
        %v932 = vpop.xlane.xlu0 %931
        %v933 = vsel %vm923, %v914, 0.0
        %934 = vadd.xlane.f32.xlu0 %v933
        %v935 = vpop.xlane.xlu0 %934
        %v936 = vsel %vm923, %v915, 0.0
        %937 = vadd.xlane.f32.xlu0 %v936
        %v938 = vpop.xlane.xlu0 %937
        %v939 = vsel %vm923, %v916, 0.0
        %940 = vadd.xlane.f32.xlu0 %v939
        %v941 = vpop.xlane.xlu0 %940
        %v942 = vsel %vm923, %v917, 0.0
        %943 = vadd.xlane.f32.xlu0 %v942
        %v944 = vpop.xlane.xlu0 %943
        %v945 = vsel %vm923, %v918, 0.0
        %946 = vadd.xlane.f32.xlu0 %v945
        %v947 = vpop.xlane.xlu0 %946
        %v948 = vsel %vm923, %v919, 0.0
        %949 = vadd.xlane.f32.xlu0 %v948
        %v950 = vpop.xlane.xlu0 %949
        %v951 = vsel %vm923, %v920, 0.0
        %952 = vadd.xlane.f32.xlu0 %v951
        %v953 = vpop.xlane.xlu0 %952
        %v954 = vsel %vm923, %v921, 0.0
        %955 = vadd.xlane.f32.xlu0 %v954
        %v956 = vpop.xlane.xlu0 %955
        %v957 = vsel %vm923, %v922, 0.0
        %958 = vadd.xlane.f32.xlu0 %v957
        %v959 = vpop.xlane.xlu0 %958
        %vm960 = vcmask 785408
        %v962 = vsel %vm960, %v846, 0
        %v965 = vsel %vm960, %v847, 0
        %v968 = vsel %vm960, %v848, 0
        %v971 = vsel %vm960, %v849, 0
        %v974 = vsel %vm960, %v850, 0
        %v977 = vsel %vm960, %v851, 0
        %v980 = vsel %vm960, %v852, 0
        %v983 = vsel %vm960, %v853, 0
        %v986 = vsel %vm960, %v854, 0
        %v989 = vsel %vm960, %v855, 0
        %v992 = vsel %vm960, %v856, 0
        %v995 = vsel %vm960, %v857, 0
        %997 = vmatpush.msra.mxu0 0.0
        %998 = vmatpush.msra.mxu0 0.0
        %999 = vmatpush.msra.mxu0 0.0
        %1000 = vmatpush.msra.mxu0 0.0
        %1001 = vmatpush.msra.mxu0 %v959
        %1002 = vmatpush.msra.mxu0 %v956
        %1003 = vmatpush.msra.mxu0 %v953
        %1004 = vmatpush.msra.mxu0 %v950
        %1005 = vmatpush.msra.mxu0 %v947
        %1006 = vmatpush.msra.mxu0 %v944
        %1007 = vmatpush.msra.mxu0 %v941
        %1008 = vmatpush.msra.mxu0 %v938
        %1009 = vmatpush.msra.mxu0 %v935
        %1010 = vmatpush.msra.mxu0 %v932
        %1011 = vmatpush.msra.mxu0 %v929
        %1012 = vmatpush.msra.mxu0 %v926
        %1013 = vmatmul.f32.gmra.mxu0 %v962
        %v1014 = vpop.f32.mrf.mxu0
        %v1015 = vadd.f32 0.0, %v1014
        %1016 = vmatmul.f32.gmra.mxu0 %v965
        %v1017 = vpop.f32.mrf.mxu0
        %v1018 = vadd.f32 0.0, %v1017
        %1019 = vmatmul.f32.gmra.mxu0 %v968
        %v1020 = vpop.f32.mrf.mxu0
        %v1021 = vadd.f32 0.0, %v1020
        %1022 = vmatmul.f32.gmra.mxu0 %v971
        %v1023 = vpop.f32.mrf.mxu0
        %v1024 = vadd.f32 0.0, %v1023
        %1025 = vmatmul.f32.gmra.mxu0 %v974
        %v1026 = vpop.f32.mrf.mxu0
        %v1027 = vadd.f32 0.0, %v1026
        %1028 = vmatmul.f32.gmra.mxu0 %v977
        %v1029 = vpop.f32.mrf.mxu0
        %v1030 = vadd.f32 0.0, %v1029
        %1031 = vmatmul.f32.gmra.mxu0 %v980
        %v1032 = vpop.f32.mrf.mxu0
        %v1033 = vadd.f32 0.0, %v1032
        %1034 = vmatmul.f32.gmra.mxu0 %v983
        %v1035 = vpop.f32.mrf.mxu0
        %v1036 = vadd.f32 0.0, %v1035
        %1037 = vmatmul.f32.gmra.mxu0 %v986
        %v1038 = vpop.f32.mrf.mxu0
        %v1039 = vadd.f32 0.0, %v1038
        %1040 = vmatmul.f32.gmra.mxu0 %v989
        %v1041 = vpop.f32.mrf.mxu0
        %v1042 = vadd.f32 0.0, %v1041
        %1043 = vmatmul.f32.gmra.mxu0 %v992
        %v1044 = vpop.f32.mrf.mxu0
        %v1045 = vadd.f32 0.0, %v1044
        %1046 = vmatmul.f32.gmra.mxu0 %v995
        %v1047 = vpop.f32.mrf.mxu0
        %v1048 = vadd.f32 0.0, %v1047
        %1049 = vdwg.mxu0
        %v1051 = vsel %vm960, %v858, 0
        %v1054 = vsel %vm960, %v859, 0
        %v1057 = vsel %vm960, %v860, 0
        %v1060 = vsel %vm960, %v861, 0
        %v1063 = vsel %vm960, %v862, 0
        %v1066 = vsel %vm960, %v863, 0
        %v1069 = vsel %vm960, %v864, 0
        %v1072 = vsel %vm960, %v865, 0
        %v1075 = vsel %vm960, %v866, 0
        %v1078 = vsel %vm960, %v867, 0
        %v1081 = vsel %vm960, %v868, 0
        %v1084 = vsel %vm960, %v869, 0
        %1086 = vmatpush.msra.mxu0 0.0
        %1087 = vmatpush.msra.mxu0 0.0
        %1088 = vmatpush.msra.mxu0 0.0
        %1089 = vmatpush.msra.mxu0 0.0
        %1090 = vmatpush.msra.mxu0 %v1048
        %1091 = vmatpush.msra.mxu0 %v1045
        %1092 = vmatpush.msra.mxu0 %v1042
        %1093 = vmatpush.msra.mxu0 %v1039
        %1094 = vmatpush.msra.mxu0 %v1036
        %1095 = vmatpush.msra.mxu0 %v1033
        %1096 = vmatpush.msra.mxu0 %v1030
        %1097 = vmatpush.msra.mxu0 %v1027
        %1098 = vmatpush.msra.mxu0 %v1024
        %1099 = vmatpush.msra.mxu0 %v1021
        %1100 = vmatpush.msra.mxu0 %v1018
        %1101 = vmatpush.msra.mxu0 %v1015
        %1102 = vmatmul.f32.gmra.mxu0 %v1051
        %v1103 = vpop.f32.mrf.mxu0
        %v1104 = vadd.f32 0.0, %v1103
        %1105 = vmatmul.f32.gmra.mxu0 %v1054
        %v1106 = vpop.f32.mrf.mxu0
        %v1107 = vadd.f32 0.0, %v1106
        %1108 = vmatmul.f32.gmra.mxu0 %v1057
        %v1109 = vpop.f32.mrf.mxu0
        %v1110 = vadd.f32 0.0, %v1109
        %1111 = vmatmul.f32.gmra.mxu0 %v1060
        %v1112 = vpop.f32.mrf.mxu0
        %v1113 = vadd.f32 0.0, %v1112
        %1114 = vmatmul.f32.gmra.mxu0 %v1063
        %v1115 = vpop.f32.mrf.mxu0
        %v1116 = vadd.f32 0.0, %v1115
        %1117 = vmatmul.f32.gmra.mxu0 %v1066
        %v1118 = vpop.f32.mrf.mxu0
        %v1119 = vadd.f32 0.0, %v1118
        %1120 = vmatmul.f32.gmra.mxu0 %v1069
        %v1121 = vpop.f32.mrf.mxu0
        %v1122 = vadd.f32 0.0, %v1121
        %1123 = vmatmul.f32.gmra.mxu0 %v1072
        %v1124 = vpop.f32.mrf.mxu0
        %v1125 = vadd.f32 0.0, %v1124
        %1126 = vmatmul.f32.gmra.mxu0 %v1075
        %v1127 = vpop.f32.mrf.mxu0
        %v1128 = vadd.f32 0.0, %v1127
        %1129 = vmatmul.f32.gmra.mxu0 %v1078
        %v1130 = vpop.f32.mrf.mxu0
        %v1131 = vadd.f32 0.0, %v1130
        %1132 = vmatmul.f32.gmra.mxu0 %v1081
        %v1133 = vpop.f32.mrf.mxu0
        %v1134 = vadd.f32 0.0, %v1133
        %1135 = vmatmul.f32.gmra.mxu0 %v1084
        %v1136 = vpop.f32.mrf.mxu0
        %v1137 = vadd.f32 0.0, %v1136
        %1138 = vdwg.mxu0
        %v1139 = vsub.f32 %v1015, %v1104
        %v1140 = vsub.f32 %v1018, %v1107
        %v1141 = vsub.f32 %v1021, %v1110
        %v1142 = vsub.f32 %v1024, %v1113
        %v1143 = vsub.f32 %v1027, %v1116
        %v1144 = vsub.f32 %v1030, %v1119
        %v1145 = vsub.f32 %v1033, %v1122
        %v1146 = vsub.f32 %v1036, %v1125
        %v1147 = vsub.f32 %v1039, %v1128
        %v1148 = vsub.f32 %v1042, %v1131
        %v1149 = vsub.f32 %v1045, %v1134
        %v1150 = vsub.f32 %v1048, %v1137
        %v1151 = vmul.f32 %v1139, %v1139
        %v1152 = vmul.f32 %v1140, %v1140
        %v1153 = vmul.f32 %v1141, %v1141
        %v1154 = vmul.f32 %v1142, %v1142
        %v1155 = vmul.f32 %v1143, %v1143
        %v1156 = vmul.f32 %v1144, %v1144
        %v1157 = vmul.f32 %v1145, %v1145
        %v1158 = vmul.f32 %v1146, %v1146
        %v1159 = vmul.f32 %v1147, %v1147
        %v1160 = vmul.f32 %v1148, %v1148
        %v1161 = vmul.f32 %v1149, %v1149
        %v1162 = vmul.f32 %v1150, %v1150
        %1163 = vmatpush.msra.mxu0 0.0
        %1164 = vmatpush.msra.mxu0 0.0
        %1165 = vmatpush.msra.mxu0 0.0
        %1166 = vmatpush.msra.mxu0 0.0
        %1167 = vmatpush.msra.mxu0 %v1162
        %1168 = vmatpush.msra.mxu0 %v1161
        %1169 = vmatpush.msra.mxu0 %v1160
        %1170 = vmatpush.msra.mxu0 %v1159
        %1171 = vmatpush.msra.mxu0 %v1158
        %1172 = vmatpush.msra.mxu0 %v1157
        %1173 = vmatpush.msra.mxu0 %v1156
        %1174 = vmatpush.msra.mxu0 %v1155
        %1175 = vmatpush.msra.mxu0 %v1154
        %1176 = vmatpush.msra.mxu0 %v1153
        %1177 = vmatpush.msra.mxu0 %v1152
        %1178 = vmatpush.msra.mxu0 %v1151
        %1179 = vmatmul.f32.gmra.mxu0 %v1051
        %v1180 = vpop.f32.mrf.mxu0
        %v1181 = vadd.f32 1e-05, %v1180
        %1182 = vmatmul.f32.gmra.mxu0 %v1054
        %v1183 = vpop.f32.mrf.mxu0
        %v1184 = vadd.f32 1e-05, %v1183
        %1185 = vmatmul.f32.gmra.mxu0 %v1057
        %v1186 = vpop.f32.mrf.mxu0
        %v1187 = vadd.f32 1e-05, %v1186
        %1188 = vmatmul.f32.gmra.mxu0 %v1060
        %v1189 = vpop.f32.mrf.mxu0
        %v1190 = vadd.f32 1e-05, %v1189
        %1191 = vmatmul.f32.gmra.mxu0 %v1063
        %v1192 = vpop.f32.mrf.mxu0
        %v1193 = vadd.f32 1e-05, %v1192
        %1194 = vmatmul.f32.gmra.mxu0 %v1066
        %v1195 = vpop.f32.mrf.mxu0
        %v1196 = vadd.f32 1e-05, %v1195
        %1197 = vmatmul.f32.gmra.mxu0 %v1069
        %v1198 = vpop.f32.mrf.mxu0
        %v1199 = vadd.f32 1e-05, %v1198
        %1200 = vmatmul.f32.gmra.mxu0 %v1072
        %v1201 = vpop.f32.mrf.mxu0
        %v1202 = vadd.f32 1e-05, %v1201
        %1203 = vmatmul.f32.gmra.mxu0 %v1075
        %v1204 = vpop.f32.mrf.mxu0
        %v1205 = vadd.f32 1e-05, %v1204
        %1206 = vmatmul.f32.gmra.mxu0 %v1078
        %v1207 = vpop.f32.mrf.mxu0
        %v1208 = vadd.f32 1e-05, %v1207
        %1209 = vmatmul.f32.gmra.mxu0 %v1081
        %v1210 = vpop.f32.mrf.mxu0
        %v1211 = vadd.f32 1e-05, %v1210
        %1212 = vmatmul.f32.gmra.mxu0 %v1084
        %v1213 = vpop.f32.mrf.mxu0
        %v1214 = vadd.f32 1e-05, %v1213
        %1215 = vdwg.mxu0
        %v1216 = vrsqrt.pop %v1181
        %v1217 = vmul.f32 %v1216, %v1181
        %v1218 = vmul.f32 %v1217, %v1216
        %v1219 = vmul.f32 0.5, %v1218
        %v1220 = vsub.f32 1.5, %v1219
        %v1221 = vmul.f32 %v1216, %v1220
        %vm1222 = vweird.f32 %v1181
        %vm1223 = vweird.f32 %v1216
        %vm1224 = vmor %vm1222, %vm1223
        %v1225 = vsel %vm1224, %v1216, %v1221
        %v1226 = vrsqrt.pop %v1184
        %v1227 = vmul.f32 %v1226, %v1184
        %v1228 = vmul.f32 %v1227, %v1226
        %v1229 = vmul.f32 0.5, %v1228
        %v1230 = vsub.f32 1.5, %v1229
        %v1231 = vmul.f32 %v1226, %v1230
        %vm1232 = vweird.f32 %v1184
        %vm1233 = vweird.f32 %v1226
        %vm1234 = vmor %vm1232, %vm1233
        %v1235 = vsel %vm1234, %v1226, %v1231
        %v1236 = vrsqrt.pop %v1187
        %v1237 = vmul.f32 %v1236, %v1187
        %v1238 = vmul.f32 %v1237, %v1236
        %v1239 = vmul.f32 0.5, %v1238
        %v1240 = vsub.f32 1.5, %v1239
        %v1241 = vmul.f32 %v1236, %v1240
        %vm1242 = vweird.f32 %v1187
        %vm1243 = vweird.f32 %v1236
        %vm1244 = vmor %vm1242, %vm1243
        %v1245 = vsel %vm1244, %v1236, %v1241
        %v1246 = vrsqrt.pop %v1190
        %v1247 = vmul.f32 %v1246, %v1190
        %v1248 = vmul.f32 %v1247, %v1246
        %v1249 = vmul.f32 0.5, %v1248
        %v1250 = vsub.f32 1.5, %v1249
        %v1251 = vmul.f32 %v1246, %v1250
        %vm1252 = vweird.f32 %v1190
        %vm1253 = vweird.f32 %v1246
        %vm1254 = vmor %vm1252, %vm1253
        %v1255 = vsel %vm1254, %v1246, %v1251
        %v1256 = vrsqrt.pop %v1193
        %v1257 = vmul.f32 %v1256, %v1193
        %v1258 = vmul.f32 %v1257, %v1256
        %v1259 = vmul.f32 0.5, %v1258
        %v1260 = vsub.f32 1.5, %v1259
        %v1261 = vmul.f32 %v1256, %v1260
        %vm1262 = vweird.f32 %v1193
        %vm1263 = vweird.f32 %v1256
        %vm1264 = vmor %vm1262, %vm1263
        %v1265 = vsel %vm1264, %v1256, %v1261
        %v1266 = vrsqrt.pop %v1196
        %v1267 = vmul.f32 %v1266, %v1196
        %v1268 = vmul.f32 %v1267, %v1266
        %v1269 = vmul.f32 0.5, %v1268
        %v1270 = vsub.f32 1.5, %v1269
        %v1271 = vmul.f32 %v1266, %v1270
        %vm1272 = vweird.f32 %v1196
        %vm1273 = vweird.f32 %v1266
        %vm1274 = vmor %vm1272, %vm1273
        %v1275 = vsel %vm1274, %v1266, %v1271
        %v1276 = vrsqrt.pop %v1199
        %v1277 = vmul.f32 %v1276, %v1199
        %v1278 = vmul.f32 %v1277, %v1276
        %v1279 = vmul.f32 0.5, %v1278
        %v1280 = vsub.f32 1.5, %v1279
        %v1281 = vmul.f32 %v1276, %v1280
        %vm1282 = vweird.f32 %v1199
        %vm1283 = vweird.f32 %v1276
        %vm1284 = vmor %vm1282, %vm1283
        %v1285 = vsel %vm1284, %v1276, %v1281
        %v1286 = vrsqrt.pop %v1202
        %v1287 = vmul.f32 %v1286, %v1202
        %v1288 = vmul.f32 %v1287, %v1286
        %v1289 = vmul.f32 0.5, %v1288
        %v1290 = vsub.f32 1.5, %v1289
        %v1291 = vmul.f32 %v1286, %v1290
        %vm1292 = vweird.f32 %v1202
        %vm1293 = vweird.f32 %v1286
        %vm1294 = vmor %vm1292, %vm1293
        %v1295 = vsel %vm1294, %v1286, %v1291
        %v1296 = vrsqrt.pop %v1205
        %v1297 = vmul.f32 %v1296, %v1205
        %v1298 = vmul.f32 %v1297, %v1296
        %v1299 = vmul.f32 0.5, %v1298
        %v1300 = vsub.f32 1.5, %v1299
        %v1301 = vmul.f32 %v1296, %v1300
        %vm1302 = vweird.f32 %v1205
        %vm1303 = vweird.f32 %v1296
        %vm1304 = vmor %vm1302, %vm1303
        %v1305 = vsel %vm1304, %v1296, %v1301
        %v1306 = vrsqrt.pop %v1208
        %v1307 = vmul.f32 %v1306, %v1208
        %v1308 = vmul.f32 %v1307, %v1306
        %v1309 = vmul.f32 0.5, %v1308
        %v1310 = vsub.f32 1.5, %v1309
        %v1311 = vmul.f32 %v1306, %v1310
        %vm1312 = vweird.f32 %v1208
        %vm1313 = vweird.f32 %v1306
        %vm1314 = vmor %vm1312, %vm1313
        %v1315 = vsel %vm1314, %v1306, %v1311
        %v1316 = vrsqrt.pop %v1211
        %v1317 = vmul.f32 %v1316, %v1211
        %v1318 = vmul.f32 %v1317, %v1316
        %v1319 = vmul.f32 0.5, %v1318
        %v1320 = vsub.f32 1.5, %v1319
        %v1321 = vmul.f32 %v1316, %v1320
        %vm1322 = vweird.f32 %v1211
        %vm1323 = vweird.f32 %v1316
        %vm1324 = vmor %vm1322, %vm1323
        %v1325 = vsel %vm1324, %v1316, %v1321
        %v1326 = vrsqrt.pop %v1214
        %v1327 = vmul.f32 %v1326, %v1214
        %v1328 = vmul.f32 %v1327, %v1326
        %v1329 = vmul.f32 0.5, %v1328
        %v1330 = vsub.f32 1.5, %v1329
        %v1331 = vmul.f32 %v1326, %v1330
        %vm1332 = vweird.f32 %v1214
        %vm1333 = vweird.f32 %v1326
        %vm1334 = vmor %vm1332, %vm1333
        %v1335 = vsel %vm1334, %v1326, %v1331
        %v1336 = vmul.f32 %v1139, %v1225
        %v1337 = vmul.f32 %v1140, %v1235
        %v1338 = vmul.f32 %v1141, %v1245
        %v1339 = vmul.f32 %v1142, %v1255
        %v1340 = vmul.f32 %v1143, %v1265
        %v1341 = vmul.f32 %v1144, %v1275
        %v1342 = vmul.f32 %v1145, %v1285
        %v1343 = vmul.f32 %v1146, %v1295
        %v1344 = vmul.f32 %v1147, %v1305
        %v1345 = vmul.f32 %v1148, %v1315
        %v1346 = vmul.f32 %v1149, %v1325
        %v1347 = vmul.f32 %v1150, %v1335
        %v1348 = vmul.f32 %v1336, %v870
        %v1349 = vmul.f32 %v1337, %v871
        %v1350 = vmul.f32 %v1338, %v872
        %v1351 = vmul.f32 %v1339, %v873
        %v1352 = vmul.f32 %v1340, %v874
        %v1353 = vmul.f32 %v1341, %v875
        %v1354 = vmul.f32 %v1342, %v876
        %v1355 = vmul.f32 %v1343, %v877
        %v1356 = vmul.f32 %v1344, %v878
        %v1357 = vmul.f32 %v1345, %v879
        %v1358 = vmul.f32 %v1346, %v880
        %v1359 = vmul.f32 %v1347, %v881
        %v1360 = vadd.f32 %v1348, %v882
        %v1361 = vadd.f32 %v1349, %v883
        %v1362 = vadd.f32 %v1350, %v884
        %v1363 = vadd.f32 %v1351, %v885
        %v1364 = vadd.f32 %v1352, %v886
        %v1365 = vadd.f32 %v1353, %v887
        %v1366 = vadd.f32 %v1354, %v888
        %v1367 = vadd.f32 %v1355, %v889
        %v1368 = vadd.f32 %v1356, %v890
        %v1369 = vadd.f32 %v1357, %v891
        %v1370 = vadd.f32 %v1358, %v892
        %v1371 = vadd.f32 %v1359, %v893
        %v1372 = vxor.u32 %v1360, 2147483648
        %v1373 = vxor.u32 %v1361, 2147483648
        %v1374 = vxor.u32 %v1362, 2147483648
        %v1375 = vxor.u32 %v1363, 2147483648
        %v1376 = vxor.u32 %v1364, 2147483648
        %v1377 = vxor.u32 %v1365, 2147483648
        %v1378 = vxor.u32 %v1366, 2147483648
        %v1379 = vxor.u32 %v1367, 2147483648
        %v1380 = vxor.u32 %v1368, 2147483648
        %v1381 = vxor.u32 %v1369, 2147483648
        %v1382 = vxor.u32 %v1370, 2147483648
        %v1383 = vxor.u32 %v1371, 2147483648
        %v1384 = vmul.f32 %v1372, 1.442695
        %v1385 = vpow.pop %v1384
        %v1386 = vmul.f32 %v1373, 1.442695
        %v1387 = vpow.pop %v1386
        %v1388 = vmul.f32 %v1374, 1.442695
        %v1389 = vpow.pop %v1388
        %v1390 = vmul.f32 %v1375, 1.442695
        %v1391 = vpow.pop %v1390
        %v1392 = vmul.f32 %v1376, 1.442695
        %v1393 = vpow.pop %v1392
        %v1394 = vmul.f32 %v1377, 1.442695
        %v1395 = vpow.pop %v1394
        %v1396 = vmul.f32 %v1378, 1.442695
        %v1397 = vpow.pop %v1396
        %v1398 = vmul.f32 %v1379, 1.442695
        %v1399 = vpow.pop %v1398
        %v1400 = vmul.f32 %v1380, 1.442695
        %v1401 = vpow.pop %v1400
        %v1402 = vmul.f32 %v1381, 1.442695
        %v1403 = vpow.pop %v1402
        %v1404 = vmul.f32 %v1382, 1.442695
        %v1405 = vpow.pop %v1404
        %v1406 = vmul.f32 %v1383, 1.442695
        %v1407 = vpow.pop %v1406
        %v1408 = vadd.f32 %v1385, 1.0
        %v1409 = vadd.f32 %v1387, 1.0
        %v1410 = vadd.f32 %v1389, 1.0
        %v1411 = vadd.f32 %v1391, 1.0
        %v1412 = vadd.f32 %v1393, 1.0
        %v1413 = vadd.f32 %v1395, 1.0
        %v1414 = vadd.f32 %v1397, 1.0
        %v1415 = vadd.f32 %v1399, 1.0
        %v1416 = vadd.f32 %v1401, 1.0
        %v1417 = vadd.f32 %v1403, 1.0
        %v1418 = vadd.f32 %v1405, 1.0
        %v1419 = vadd.f32 %v1407, 1.0
        %v1420 = vrcp.pop %v1408
        %v1421 = vmul.f32 %v1408, %v1420
        %v1422 = vsub.f32 1.0, %v1421
        %v1423 = vmul.f32 %v1420, %v1422
        %v1424 = vadd.f32 %v1420, %v1423
        %vm1425 = vweird.f32 %v1408
        %vm1426 = vweird.f32 %v1420
        %vm1427 = vmor %vm1425, %vm1426
        %v1428 = vsel %vm1427, %v1420, %v1424
        %v1429 = vand.u32 2147483647, %v1408
        %vm1430 = vcmp.eq.f32.partialorder %v1429, 8.507059e+37
        %v1431 = vand.u32 %v1408, 2147483648
        %v1432 = vor.u32 1.1754944e-38, %v1431
        %v1433 = vsel %vm1430, %v1432, %v1428
        %v1434 = vmul.f32 1.0, %v1433
        %v1435 = vrcp.pop %v1409
        %v1436 = vmul.f32 %v1409, %v1435
        %v1437 = vsub.f32 1.0, %v1436
        %v1438 = vmul.f32 %v1435, %v1437
        %v1439 = vadd.f32 %v1435, %v1438
        %vm1440 = vweird.f32 %v1409
        %vm1441 = vweird.f32 %v1435
        %vm1442 = vmor %vm1440, %vm1441
        %v1443 = vsel %vm1442, %v1435, %v1439
        %v1444 = vand.u32 2147483647, %v1409
        %vm1445 = vcmp.eq.f32.partialorder %v1444, 8.507059e+37
        %v1446 = vand.u32 %v1409, 2147483648
        %v1447 = vor.u32 1.1754944e-38, %v1446
        %v1448 = vsel %vm1445, %v1447, %v1443
        %v1449 = vmul.f32 1.0, %v1448
        %v1450 = vrcp.pop %v1410
        %v1451 = vmul.f32 %v1410, %v1450
        %v1452 = vsub.f32 1.0, %v1451
        %v1453 = vmul.f32 %v1450, %v1452
        %v1454 = vadd.f32 %v1450, %v1453
        %vm1455 = vweird.f32 %v1410
        %vm1456 = vweird.f32 %v1450
        %vm1457 = vmor %vm1455, %vm1456
        %v1458 = vsel %vm1457, %v1450, %v1454
        %v1459 = vand.u32 2147483647, %v1410
        %vm1460 = vcmp.eq.f32.partialorder %v1459, 8.507059e+37
        %v1461 = vand.u32 %v1410, 2147483648
        %v1462 = vor.u32 1.1754944e-38, %v1461
        %v1463 = vsel %vm1460, %v1462, %v1458
        %v1464 = vmul.f32 1.0, %v1463
        %v1465 = vrcp.pop %v1411
        %v1466 = vmul.f32 %v1411, %v1465
        %v1467 = vsub.f32 1.0, %v1466
        %v1468 = vmul.f32 %v1465, %v1467
        %v1469 = vadd.f32 %v1465, %v1468
        %vm1470 = vweird.f32 %v1411
        %vm1471 = vweird.f32 %v1465
        %vm1472 = vmor %vm1470, %vm1471
        %v1473 = vsel %vm1472, %v1465, %v1469
        %v1474 = vand.u32 2147483647, %v1411
        %vm1475 = vcmp.eq.f32.partialorder %v1474, 8.507059e+37
        %v1476 = vand.u32 %v1411, 2147483648
        %v1477 = vor.u32 1.1754944e-38, %v1476
        %v1478 = vsel %vm1475, %v1477, %v1473
        %v1479 = vmul.f32 1.0, %v1478
        %v1480 = vrcp.pop %v1412
        %v1481 = vmul.f32 %v1412, %v1480
        %v1482 = vsub.f32 1.0, %v1481
        %v1483 = vmul.f32 %v1480, %v1482
        %v1484 = vadd.f32 %v1480, %v1483
        %vm1485 = vweird.f32 %v1412
        %vm1486 = vweird.f32 %v1480
        %vm1487 = vmor %vm1485, %vm1486
        %v1488 = vsel %vm1487, %v1480, %v1484
        %v1489 = vand.u32 2147483647, %v1412
        %vm1490 = vcmp.eq.f32.partialorder %v1489, 8.507059e+37
        %v1491 = vand.u32 %v1412, 2147483648
        %v1492 = vor.u32 1.1754944e-38, %v1491
        %v1493 = vsel %vm1490, %v1492, %v1488
        %v1494 = vmul.f32 1.0, %v1493
        %v1495 = vrcp.pop %v1413
        %v1496 = vmul.f32 %v1413, %v1495
        %v1497 = vsub.f32 1.0, %v1496
        %v1498 = vmul.f32 %v1495, %v1497
        %v1499 = vadd.f32 %v1495, %v1498
        %vm1500 = vweird.f32 %v1413
        %vm1501 = vweird.f32 %v1495
        %vm1502 = vmor %vm1500, %vm1501
        %v1503 = vsel %vm1502, %v1495, %v1499
        %v1504 = vand.u32 2147483647, %v1413
        %vm1505 = vcmp.eq.f32.partialorder %v1504, 8.507059e+37
        %v1506 = vand.u32 %v1413, 2147483648
        %v1507 = vor.u32 1.1754944e-38, %v1506
        %v1508 = vsel %vm1505, %v1507, %v1503
        %v1509 = vmul.f32 1.0, %v1508
        %v1510 = vrcp.pop %v1414
        %v1511 = vmul.f32 %v1414, %v1510
        %v1512 = vsub.f32 1.0, %v1511
        %v1513 = vmul.f32 %v1510, %v1512
        %v1514 = vadd.f32 %v1510, %v1513
        %vm1515 = vweird.f32 %v1414
        %vm1516 = vweird.f32 %v1510
        %vm1517 = vmor %vm1515, %vm1516
        %v1518 = vsel %vm1517, %v1510, %v1514
        %v1519 = vand.u32 2147483647, %v1414
        %vm1520 = vcmp.eq.f32.partialorder %v1519, 8.507059e+37
        %v1521 = vand.u32 %v1414, 2147483648
        %v1522 = vor.u32 1.1754944e-38, %v1521
        %v1523 = vsel %vm1520, %v1522, %v1518
        %v1524 = vmul.f32 1.0, %v1523
        %v1525 = vrcp.pop %v1415
        %v1526 = vmul.f32 %v1415, %v1525
        %v1527 = vsub.f32 1.0, %v1526
        %v1528 = vmul.f32 %v1525, %v1527
        %v1529 = vadd.f32 %v1525, %v1528
        %vm1530 = vweird.f32 %v1415
        %vm1531 = vweird.f32 %v1525
        %vm1532 = vmor %vm1530, %vm1531
        %v1533 = vsel %vm1532, %v1525, %v1529
        %v1534 = vand.u32 2147483647, %v1415
        %vm1535 = vcmp.eq.f32.partialorder %v1534, 8.507059e+37
        %v1536 = vand.u32 %v1415, 2147483648
        %v1537 = vor.u32 1.1754944e-38, %v1536
        %v1538 = vsel %vm1535, %v1537, %v1533
        %v1539 = vmul.f32 1.0, %v1538
        %v1540 = vrcp.pop %v1416
        %v1541 = vmul.f32 %v1416, %v1540
        %v1542 = vsub.f32 1.0, %v1541
        %v1543 = vmul.f32 %v1540, %v1542
        %v1544 = vadd.f32 %v1540, %v1543
        %vm1545 = vweird.f32 %v1416
        %vm1546 = vweird.f32 %v1540
        %vm1547 = vmor %vm1545, %vm1546
        %v1548 = vsel %vm1547, %v1540, %v1544
        %v1549 = vand.u32 2147483647, %v1416
        %vm1550 = vcmp.eq.f32.partialorder %v1549, 8.507059e+37
        %v1551 = vand.u32 %v1416, 2147483648
        %v1552 = vor.u32 1.1754944e-38, %v1551
        %v1553 = vsel %vm1550, %v1552, %v1548
        %v1554 = vmul.f32 1.0, %v1553
        %v1555 = vrcp.pop %v1417
        %v1556 = vmul.f32 %v1417, %v1555
        %v1557 = vsub.f32 1.0, %v1556
        %v1558 = vmul.f32 %v1555, %v1557
        %v1559 = vadd.f32 %v1555, %v1558
        %vm1560 = vweird.f32 %v1417
        %vm1561 = vweird.f32 %v1555
        %vm1562 = vmor %vm1560, %vm1561
        %v1563 = vsel %vm1562, %v1555, %v1559
        %v1564 = vand.u32 2147483647, %v1417
        %vm1565 = vcmp.eq.f32.partialorder %v1564, 8.507059e+37
        %v1566 = vand.u32 %v1417, 2147483648
        %v1567 = vor.u32 1.1754944e-38, %v1566
        %v1568 = vsel %vm1565, %v1567, %v1563
        %v1569 = vmul.f32 1.0, %v1568
        %v1570 = vrcp.pop %v1418
        %v1571 = vmul.f32 %v1418, %v1570
        %v1572 = vsub.f32 1.0, %v1571
        %v1573 = vmul.f32 %v1570, %v1572
        %v1574 = vadd.f32 %v1570, %v1573
        %vm1575 = vweird.f32 %v1418
        %vm1576 = vweird.f32 %v1570
        %vm1577 = vmor %vm1575, %vm1576
        %v1578 = vsel %vm1577, %v1570, %v1574
        %v1579 = vand.u32 2147483647, %v1418
        %vm1580 = vcmp.eq.f32.partialorder %v1579, 8.507059e+37
        %v1581 = vand.u32 %v1418, 2147483648
        %v1582 = vor.u32 1.1754944e-38, %v1581
        %v1583 = vsel %vm1580, %v1582, %v1578
        %v1584 = vmul.f32 1.0, %v1583
        %v1585 = vrcp.pop %v1419
        %v1586 = vmul.f32 %v1419, %v1585
        %v1587 = vsub.f32 1.0, %v1586
        %v1588 = vmul.f32 %v1585, %v1587
        %v1589 = vadd.f32 %v1585, %v1588
        %vm1590 = vweird.f32 %v1419
        %vm1591 = vweird.f32 %v1585
        %vm1592 = vmor %vm1590, %vm1591
        %v1593 = vsel %vm1592, %v1585, %v1589
        %v1594 = vand.u32 2147483647, %v1419
        %vm1595 = vcmp.eq.f32.partialorder %v1594, 8.507059e+37
        %v1596 = vand.u32 %v1419, 2147483648
        %v1597 = vor.u32 1.1754944e-38, %v1596
        %v1598 = vsel %vm1595, %v1597, %v1593
        %v1599 = vmul.f32 1.0, %v1598
        %v1600 = vadd.f32 %v1434, 1.0
        %v1601 = vadd.f32 %v1449, 1.0
        %v1602 = vadd.f32 %v1464, 1.0
        %v1603 = vadd.f32 %v1479, 1.0
        %v1604 = vadd.f32 %v1494, 1.0
        %v1605 = vadd.f32 %v1509, 1.0
        %v1606 = vadd.f32 %v1524, 1.0
        %v1607 = vadd.f32 %v1539, 1.0
        %v1608 = vadd.f32 %v1554, 1.0
        %v1609 = vadd.f32 %v1569, 1.0
        %v1610 = vadd.f32 %v1584, 1.0
        %v1611 = vadd.f32 %v1599, 1.0
        %1613 = vset.pattern.permute.xlu0 0
        %1614 = vperm.xlu0 %1613, %v1600
        %v1615 = vpop.permute.xlu0 %1614
        %1618 = vset.pattern.permute.xlu0 0
        %1619 = vperm.xlu0 %1618, %v1601
        %v1620 = vpop.permute.xlu0 %1619
        %1623 = vset.pattern.permute.xlu0 0
        %1624 = vperm.xlu0 %1623, %v1602
        %v1625 = vpop.permute.xlu0 %1624
        %1628 = vset.pattern.permute.xlu0 0
        %1629 = vperm.xlu0 %1628, %v1603
        %v1630 = vpop.permute.xlu0 %1629
        %1633 = vset.pattern.permute.xlu0 0
        %1634 = vperm.xlu0 %1633, %v1604
        %v1635 = vpop.permute.xlu0 %1634
        %1638 = vset.pattern.permute.xlu0 0
        %1639 = vperm.xlu0 %1638, %v1605
        %v1640 = vpop.permute.xlu0 %1639
        %1643 = vset.pattern.permute.xlu0 0
        %1644 = vperm.xlu0 %1643, %v1606
        %v1645 = vpop.permute.xlu0 %1644
        %1648 = vset.pattern.permute.xlu0 0
        %1649 = vperm.xlu0 %1648, %v1607
        %v1650 = vpop.permute.xlu0 %1649
        %1653 = vset.pattern.permute.xlu0 0
        %1654 = vperm.xlu0 %1653, %v1608
        %v1655 = vpop.permute.xlu0 %1654
        %1658 = vset.pattern.permute.xlu0 0
        %1659 = vperm.xlu0 %1658, %v1609
        %v1660 = vpop.permute.xlu0 %1659
        %1663 = vset.pattern.permute.xlu0 0
        %1664 = vperm.xlu0 %1663, %v1610
        %v1665 = vpop.permute.xlu0 %1664
        %1668 = vset.pattern.permute.xlu0 0
        %1669 = vperm.xlu0 %1668, %v1611
        %v1670 = vpop.permute.xlu0 %1669
        %v1672 = vmul.f32 %v896, %v1615
        %v1673 = vmul.f32 %v897, %v1620
        %v1674 = vmul.f32 %v898, %v1625
        %v1675 = vmul.f32 %v899, %v1630
        %v1676 = vmul.f32 %v900, %v1635
        %v1677 = vmul.f32 %v901, %v1640
        %v1678 = vmul.f32 %v902, %v1645
        %v1679 = vmul.f32 %v903, %v1650
        %v1680 = vmul.f32 %v904, %v1655
        %v1681 = vmul.f32 %v905, %v1660
        %v1682 = vmul.f32 %v906, %v1665
        %v1683 = vmul.f32 %v907, %v1670
        %v1684 = vpack.c.bf16 %v1673, %v1672
        %v1685 = vpack.c.bf16 %v1675, %v1674
        %v1686 = vpack.c.bf16 %v1677, %v1676
        %v1687 = vpack.c.bf16 %v1679, %v1678
        %v1688 = vpack.c.bf16 %v1681, %v1680
        %v1689 = vpack.c.bf16 %v1683, %v1682
        %v1692 = vunpack.c.l.b16 %v894
        %v1693 = vunpack.c.l.b16 %v895
        %v1694 = vpack.c.b16 %v1693, %v1692
        %v1696 = vsel %vm960, %v1694, 0
        %1698 = vmatpush.bf16.msra.mxu0 0
        %1699 = vmatpush.bf16.msra.mxu0 0
        %1700 = vmatpush.bf16.msra.mxu0 %v1689
        %1701 = vmatpush.bf16.msra.mxu0 %v1688
        %1702 = vmatpush.bf16.msra.mxu0 %v1687
        %1703 = vmatpush.bf16.msra.mxu0 %v1686
        %1704 = vmatpush.bf16.msra.mxu0 %v1685
        %1705 = vmatpush.bf16.msra.mxu0 %v1684
        %1706 = vmatmul.bf16.gmra.mxu0 %v1696
        %v1707 = vpop.f32.mrf.mxu0
        %v1708 = vadd.f32 0.0, %v1707
        %v1709 = vpop.f32.mrf.mxu0
        %v1710 = vadd.f32 0.0, %v1709
        %1711 = vdwg.mxu0
        %v1712 = vmul.f32 %v824, %v834
        %v1713 = vmul.f32 %v826, %v835
        %v1714 = vmul.f32 %v829, %v836
        %v1715 = vmul.f32 %v831, %v837
        %v1716 = vmul.f32 %v824, %v838
        %v1717 = vmul.f32 %v826, %v839
        %v1718 = vmul.f32 %v829, %v840
        %v1719 = vmul.f32 %v831, %v841
        %v1720 = vmul.f32 %v824, %v842
        %v1721 = vmul.f32 %v826, %v843
        %v1722 = vmul.f32 %v829, %v844
        %v1723 = vmul.f32 %v831, %v845
        %v1724 = vmul.f32 %v1712, %v909
        %v1725 = vmul.f32 %v1713, %v909
        %v1726 = vmul.f32 %v1714, %v909
        %v1727 = vmul.f32 %v1715, %v909
        %v1728 = vmul.f32 %v1716, %v909
        %v1729 = vmul.f32 %v1717, %v909
        %v1730 = vmul.f32 %v1718, %v909
        %v1731 = vmul.f32 %v1719, %v909
        %v1732 = vmul.f32 %v1720, %v909
        %v1733 = vmul.f32 %v1721, %v909
        %v1734 = vmul.f32 %v1722, %v909
        %v1735 = vmul.f32 %v1723, %v909
        %v1736 = vsel %vm923, %v1724, 0.0
        %1737 = vadd.xlane.f32.xlu0 %v1736
        %v1738 = vpop.xlane.xlu0 %1737
        %v1739 = vsel %vm923, %v1725, 0.0
        %1740 = vadd.xlane.f32.xlu0 %v1739
        %v1741 = vpop.xlane.xlu0 %1740
        %v1742 = vsel %vm923, %v1726, 0.0
        %1743 = vadd.xlane.f32.xlu0 %v1742
        %v1744 = vpop.xlane.xlu0 %1743
        %v1745 = vsel %vm923, %v1727, 0.0
        %1746 = vadd.xlane.f32.xlu0 %v1745
        %v1747 = vpop.xlane.xlu0 %1746
        %v1748 = vsel %vm923, %v1728, 0.0
        %1749 = vadd.xlane.f32.xlu0 %v1748
        %v1750 = vpop.xlane.xlu0 %1749
        %v1751 = vsel %vm923, %v1729, 0.0
        %1752 = vadd.xlane.f32.xlu0 %v1751
        %v1753 = vpop.xlane.xlu0 %1752
        %v1754 = vsel %vm923, %v1730, 0.0
        %1755 = vadd.xlane.f32.xlu0 %v1754
        %v1756 = vpop.xlane.xlu0 %1755
        %v1757 = vsel %vm923, %v1731, 0.0
        %1758 = vadd.xlane.f32.xlu0 %v1757
        %v1759 = vpop.xlane.xlu0 %1758
        %v1760 = vsel %vm923, %v1732, 0.0
        %1761 = vadd.xlane.f32.xlu0 %v1760
        %v1762 = vpop.xlane.xlu0 %1761
        %v1763 = vsel %vm923, %v1733, 0.0
        %1764 = vadd.xlane.f32.xlu0 %v1763
        %v1765 = vpop.xlane.xlu0 %1764
        %v1766 = vsel %vm923, %v1734, 0.0
        %1767 = vadd.xlane.f32.xlu0 %v1766
        %v1768 = vpop.xlane.xlu0 %1767
        %v1769 = vsel %vm923, %v1735, 0.0
        %1770 = vadd.xlane.f32.xlu0 %v1769
        %v1771 = vpop.xlane.xlu0 %1770
        %1772 = vmatpush.msra.mxu0 0.0
        %1773 = vmatpush.msra.mxu0 0.0
        %1774 = vmatpush.msra.mxu0 0.0
        %1775 = vmatpush.msra.mxu0 0.0
        %1776 = vmatpush.msra.mxu0 %v1771
        %1777 = vmatpush.msra.mxu0 %v1768
        %1778 = vmatpush.msra.mxu0 %v1765
        %1779 = vmatpush.msra.mxu0 %v1762
        %1780 = vmatpush.msra.mxu0 %v1759
        %1781 = vmatpush.msra.mxu0 %v1756
        %1782 = vmatpush.msra.mxu0 %v1753
        %1783 = vmatpush.msra.mxu0 %v1750
        %1784 = vmatpush.msra.mxu0 %v1747
        %1785 = vmatpush.msra.mxu0 %v1744
        %1786 = vmatpush.msra.mxu0 %v1741
        %1787 = vmatpush.msra.mxu0 %v1738
        %1788 = vmatmul.f32.gmra.mxu0 %v962
        %v1789 = vpop.f32.mrf.mxu0
        %v1790 = vadd.f32 0.0, %v1789
        %1791 = vmatmul.f32.gmra.mxu0 %v965
        %v1792 = vpop.f32.mrf.mxu0
        %v1793 = vadd.f32 0.0, %v1792
        %1794 = vmatmul.f32.gmra.mxu0 %v968
        %v1795 = vpop.f32.mrf.mxu0
        %v1796 = vadd.f32 0.0, %v1795
        %1797 = vmatmul.f32.gmra.mxu0 %v971
        %v1798 = vpop.f32.mrf.mxu0
        %v1799 = vadd.f32 0.0, %v1798
        %1800 = vmatmul.f32.gmra.mxu0 %v974
        %v1801 = vpop.f32.mrf.mxu0
        %v1802 = vadd.f32 0.0, %v1801
        %1803 = vmatmul.f32.gmra.mxu0 %v977
        %v1804 = vpop.f32.mrf.mxu0
        %v1805 = vadd.f32 0.0, %v1804
        %1806 = vmatmul.f32.gmra.mxu0 %v980
        %v1807 = vpop.f32.mrf.mxu0
        %v1808 = vadd.f32 0.0, %v1807
        %1809 = vmatmul.f32.gmra.mxu0 %v983
        %v1810 = vpop.f32.mrf.mxu0
        %v1811 = vadd.f32 0.0, %v1810
        %1812 = vmatmul.f32.gmra.mxu0 %v986
        %v1813 = vpop.f32.mrf.mxu0
        %v1814 = vadd.f32 0.0, %v1813
        %1815 = vmatmul.f32.gmra.mxu0 %v989
        %v1816 = vpop.f32.mrf.mxu0
        %v1817 = vadd.f32 0.0, %v1816
        %1818 = vmatmul.f32.gmra.mxu0 %v992
        %v1819 = vpop.f32.mrf.mxu0
        %v1820 = vadd.f32 0.0, %v1819
        %1821 = vmatmul.f32.gmra.mxu0 %v995
        %v1822 = vpop.f32.mrf.mxu0
        %v1823 = vadd.f32 0.0, %v1822
        %1824 = vdwg.mxu0
        %1825 = vmatpush.msra.mxu0 0.0
        %1826 = vmatpush.msra.mxu0 0.0
        %1827 = vmatpush.msra.mxu0 0.0
        %1828 = vmatpush.msra.mxu0 0.0
        %1829 = vmatpush.msra.mxu0 %v1823
        %1830 = vmatpush.msra.mxu0 %v1820
        %1831 = vmatpush.msra.mxu0 %v1817
        %1832 = vmatpush.msra.mxu0 %v1814
        %1833 = vmatpush.msra.mxu0 %v1811
        %1834 = vmatpush.msra.mxu0 %v1808
        %1835 = vmatpush.msra.mxu0 %v1805
        %1836 = vmatpush.msra.mxu0 %v1802
        %1837 = vmatpush.msra.mxu0 %v1799
        %1838 = vmatpush.msra.mxu0 %v1796
        %1839 = vmatpush.msra.mxu0 %v1793
        %1840 = vmatpush.msra.mxu0 %v1790
        %1841 = vmatmul.f32.gmra.mxu0 %v1051
        %v1842 = vpop.f32.mrf.mxu0
        %v1843 = vadd.f32 0.0, %v1842
        %1844 = vmatmul.f32.gmra.mxu0 %v1054
        %v1845 = vpop.f32.mrf.mxu0
        %v1846 = vadd.f32 0.0, %v1845
        %1847 = vmatmul.f32.gmra.mxu0 %v1057
        %v1848 = vpop.f32.mrf.mxu0
        %v1849 = vadd.f32 0.0, %v1848
        %1850 = vmatmul.f32.gmra.mxu0 %v1060
        %v1851 = vpop.f32.mrf.mxu0
        %v1852 = vadd.f32 0.0, %v1851
        %1853 = vmatmul.f32.gmra.mxu0 %v1063
        %v1854 = vpop.f32.mrf.mxu0
        %v1855 = vadd.f32 0.0, %v1854
        %1856 = vmatmul.f32.gmra.mxu0 %v1066
        %v1857 = vpop.f32.mrf.mxu0
        %v1858 = vadd.f32 0.0, %v1857
        %1859 = vmatmul.f32.gmra.mxu0 %v1069
        %v1860 = vpop.f32.mrf.mxu0
        %v1861 = vadd.f32 0.0, %v1860
        %1862 = vmatmul.f32.gmra.mxu0 %v1072
        %v1863 = vpop.f32.mrf.mxu0
        %v1864 = vadd.f32 0.0, %v1863
        %1865 = vmatmul.f32.gmra.mxu0 %v1075
        %v1866 = vpop.f32.mrf.mxu0
        %v1867 = vadd.f32 0.0, %v1866
        %1868 = vmatmul.f32.gmra.mxu0 %v1078
        %v1869 = vpop.f32.mrf.mxu0
        %v1870 = vadd.f32 0.0, %v1869
        %1871 = vmatmul.f32.gmra.mxu0 %v1081
        %v1872 = vpop.f32.mrf.mxu0
        %v1873 = vadd.f32 0.0, %v1872
        %1874 = vmatmul.f32.gmra.mxu0 %v1084
        %v1875 = vpop.f32.mrf.mxu0
        %v1876 = vadd.f32 0.0, %v1875
        %1877 = vdwg.mxu0
        %v1878 = vsub.f32 %v1790, %v1843
        %v1879 = vsub.f32 %v1793, %v1846
        %v1880 = vsub.f32 %v1796, %v1849
        %v1881 = vsub.f32 %v1799, %v1852
        %v1882 = vsub.f32 %v1802, %v1855
        %v1883 = vsub.f32 %v1805, %v1858
        %v1884 = vsub.f32 %v1808, %v1861
        %v1885 = vsub.f32 %v1811, %v1864
        %v1886 = vsub.f32 %v1814, %v1867
        %v1887 = vsub.f32 %v1817, %v1870
        %v1888 = vsub.f32 %v1820, %v1873
        %v1889 = vsub.f32 %v1823, %v1876
        %v1890 = vmul.f32 %v1878, %v1878
        %v1891 = vmul.f32 %v1879, %v1879
        %v1892 = vmul.f32 %v1880, %v1880
        %v1893 = vmul.f32 %v1881, %v1881
        %v1894 = vmul.f32 %v1882, %v1882
        %v1895 = vmul.f32 %v1883, %v1883
        %v1896 = vmul.f32 %v1884, %v1884
        %v1897 = vmul.f32 %v1885, %v1885
        %v1898 = vmul.f32 %v1886, %v1886
        %v1899 = vmul.f32 %v1887, %v1887
        %v1900 = vmul.f32 %v1888, %v1888
        %v1901 = vmul.f32 %v1889, %v1889
        %1902 = vmatpush.msra.mxu0 0.0
        %1903 = vmatpush.msra.mxu0 0.0
        %1904 = vmatpush.msra.mxu0 0.0
        %1905 = vmatpush.msra.mxu0 0.0
        %1906 = vmatpush.msra.mxu0 %v1901
        %1907 = vmatpush.msra.mxu0 %v1900
        %1908 = vmatpush.msra.mxu0 %v1899
        %1909 = vmatpush.msra.mxu0 %v1898
        %1910 = vmatpush.msra.mxu0 %v1897
        %1911 = vmatpush.msra.mxu0 %v1896
        %1912 = vmatpush.msra.mxu0 %v1895
        %1913 = vmatpush.msra.mxu0 %v1894
        %1914 = vmatpush.msra.mxu0 %v1893
        %1915 = vmatpush.msra.mxu0 %v1892
        %1916 = vmatpush.msra.mxu0 %v1891
        %1917 = vmatpush.msra.mxu0 %v1890
        %1918 = vmatmul.f32.gmra.mxu0 %v1051
        %v1919 = vpop.f32.mrf.mxu0
        %v1920 = vadd.f32 1e-05, %v1919
        %1921 = vmatmul.f32.gmra.mxu0 %v1054
        %v1922 = vpop.f32.mrf.mxu0
        %v1923 = vadd.f32 1e-05, %v1922
        %1924 = vmatmul.f32.gmra.mxu0 %v1057
        %v1925 = vpop.f32.mrf.mxu0
        %v1926 = vadd.f32 1e-05, %v1925
        %1927 = vmatmul.f32.gmra.mxu0 %v1060
        %v1928 = vpop.f32.mrf.mxu0
        %v1929 = vadd.f32 1e-05, %v1928
        %1930 = vmatmul.f32.gmra.mxu0 %v1063
        %v1931 = vpop.f32.mrf.mxu0
        %v1932 = vadd.f32 1e-05, %v1931
        %1933 = vmatmul.f32.gmra.mxu0 %v1066
        %v1934 = vpop.f32.mrf.mxu0
        %v1935 = vadd.f32 1e-05, %v1934
        %1936 = vmatmul.f32.gmra.mxu0 %v1069
        %v1937 = vpop.f32.mrf.mxu0
        %v1938 = vadd.f32 1e-05, %v1937
        %1939 = vmatmul.f32.gmra.mxu0 %v1072
        %v1940 = vpop.f32.mrf.mxu0
        %v1941 = vadd.f32 1e-05, %v1940
        %1942 = vmatmul.f32.gmra.mxu0 %v1075
        %v1943 = vpop.f32.mrf.mxu0
        %v1944 = vadd.f32 1e-05, %v1943
        %1945 = vmatmul.f32.gmra.mxu0 %v1078
        %v1946 = vpop.f32.mrf.mxu0
        %v1947 = vadd.f32 1e-05, %v1946
        %1948 = vmatmul.f32.gmra.mxu0 %v1081
        %v1949 = vpop.f32.mrf.mxu0
        %v1950 = vadd.f32 1e-05, %v1949
        %1951 = vmatmul.f32.gmra.mxu0 %v1084
        %v1952 = vpop.f32.mrf.mxu0
        %v1953 = vadd.f32 1e-05, %v1952
        %1954 = vdwg.mxu0
        %v1955 = vrsqrt.pop %v1920
        %v1956 = vmul.f32 %v1955, %v1920
        %v1957 = vmul.f32 %v1956, %v1955
        %v1958 = vmul.f32 0.5, %v1957
        %v1959 = vsub.f32 1.5, %v1958
        %v1960 = vmul.f32 %v1955, %v1959
        %vm1961 = vweird.f32 %v1920
        %vm1962 = vweird.f32 %v1955
        %vm1963 = vmor %vm1961, %vm1962
        %v1964 = vsel %vm1963, %v1955, %v1960
        %v1965 = vrsqrt.pop %v1923
        %v1966 = vmul.f32 %v1965, %v1923
        %v1967 = vmul.f32 %v1966, %v1965
        %v1968 = vmul.f32 0.5, %v1967
        %v1969 = vsub.f32 1.5, %v1968
        %v1970 = vmul.f32 %v1965, %v1969
        %vm1971 = vweird.f32 %v1923
        %vm1972 = vweird.f32 %v1965
        %vm1973 = vmor %vm1971, %vm1972
        %v1974 = vsel %vm1973, %v1965, %v1970
        %v1975 = vrsqrt.pop %v1926
        %v1976 = vmul.f32 %v1975, %v1926
        %v1977 = vmul.f32 %v1976, %v1975
        %v1978 = vmul.f32 0.5, %v1977
        %v1979 = vsub.f32 1.5, %v1978
        %v1980 = vmul.f32 %v1975, %v1979
        %vm1981 = vweird.f32 %v1926
        %vm1982 = vweird.f32 %v1975
        %vm1983 = vmor %vm1981, %vm1982
        %v1984 = vsel %vm1983, %v1975, %v1980
        %v1985 = vrsqrt.pop %v1929
        %v1986 = vmul.f32 %v1985, %v1929
        %v1987 = vmul.f32 %v1986, %v1985
        %v1988 = vmul.f32 0.5, %v1987
        %v1989 = vsub.f32 1.5, %v1988
        %v1990 = vmul.f32 %v1985, %v1989
        %vm1991 = vweird.f32 %v1929
        %vm1992 = vweird.f32 %v1985
        %vm1993 = vmor %vm1991, %vm1992
        %v1994 = vsel %vm1993, %v1985, %v1990
        %v1995 = vrsqrt.pop %v1932
        %v1996 = vmul.f32 %v1995, %v1932
        %v1997 = vmul.f32 %v1996, %v1995
        %v1998 = vmul.f32 0.5, %v1997
        %v1999 = vsub.f32 1.5, %v1998
        %v2000 = vmul.f32 %v1995, %v1999
        %vm2001 = vweird.f32 %v1932
        %vm2002 = vweird.f32 %v1995
        %vm2003 = vmor %vm2001, %vm2002
        %v2004 = vsel %vm2003, %v1995, %v2000
        %v2005 = vrsqrt.pop %v1935
        %v2006 = vmul.f32 %v2005, %v1935
        %v2007 = vmul.f32 %v2006, %v2005
        %v2008 = vmul.f32 0.5, %v2007
        %v2009 = vsub.f32 1.5, %v2008
        %v2010 = vmul.f32 %v2005, %v2009
        %vm2011 = vweird.f32 %v1935
        %vm2012 = vweird.f32 %v2005
        %vm2013 = vmor %vm2011, %vm2012
        %v2014 = vsel %vm2013, %v2005, %v2010
        %v2015 = vrsqrt.pop %v1938
        %v2016 = vmul.f32 %v2015, %v1938
        %v2017 = vmul.f32 %v2016, %v2015
        %v2018 = vmul.f32 0.5, %v2017
        %v2019 = vsub.f32 1.5, %v2018
        %v2020 = vmul.f32 %v2015, %v2019
        %vm2021 = vweird.f32 %v1938
        %vm2022 = vweird.f32 %v2015
        %vm2023 = vmor %vm2021, %vm2022
        %v2024 = vsel %vm2023, %v2015, %v2020
        %v2025 = vrsqrt.pop %v1941
        %v2026 = vmul.f32 %v2025, %v1941
        %v2027 = vmul.f32 %v2026, %v2025
        %v2028 = vmul.f32 0.5, %v2027
        %v2029 = vsub.f32 1.5, %v2028
        %v2030 = vmul.f32 %v2025, %v2029
        %vm2031 = vweird.f32 %v1941
        %vm2032 = vweird.f32 %v2025
        %vm2033 = vmor %vm2031, %vm2032
        %v2034 = vsel %vm2033, %v2025, %v2030
        %v2035 = vrsqrt.pop %v1944
        %v2036 = vmul.f32 %v2035, %v1944
        %v2037 = vmul.f32 %v2036, %v2035
        %v2038 = vmul.f32 0.5, %v2037
        %v2039 = vsub.f32 1.5, %v2038
        %v2040 = vmul.f32 %v2035, %v2039
        %vm2041 = vweird.f32 %v1944
        %vm2042 = vweird.f32 %v2035
        %vm2043 = vmor %vm2041, %vm2042
        %v2044 = vsel %vm2043, %v2035, %v2040
        %v2045 = vrsqrt.pop %v1947
        %v2046 = vmul.f32 %v2045, %v1947
        %v2047 = vmul.f32 %v2046, %v2045
        %v2048 = vmul.f32 0.5, %v2047
        %v2049 = vsub.f32 1.5, %v2048
        %v2050 = vmul.f32 %v2045, %v2049
        %vm2051 = vweird.f32 %v1947
        %vm2052 = vweird.f32 %v2045
        %vm2053 = vmor %vm2051, %vm2052
        %v2054 = vsel %vm2053, %v2045, %v2050
        %v2055 = vrsqrt.pop %v1950
        %v2056 = vmul.f32 %v2055, %v1950
        %v2057 = vmul.f32 %v2056, %v2055
        %v2058 = vmul.f32 0.5, %v2057
        %v2059 = vsub.f32 1.5, %v2058
        %v2060 = vmul.f32 %v2055, %v2059
        %vm2061 = vweird.f32 %v1950
        %vm2062 = vweird.f32 %v2055
        %vm2063 = vmor %vm2061, %vm2062
        %v2064 = vsel %vm2063, %v2055, %v2060
        %v2065 = vrsqrt.pop %v1953
        %v2066 = vmul.f32 %v2065, %v1953
        %v2067 = vmul.f32 %v2066, %v2065
        %v2068 = vmul.f32 0.5, %v2067
        %v2069 = vsub.f32 1.5, %v2068
        %v2070 = vmul.f32 %v2065, %v2069
        %vm2071 = vweird.f32 %v1953
        %vm2072 = vweird.f32 %v2065
        %vm2073 = vmor %vm2071, %vm2072
        %v2074 = vsel %vm2073, %v2065, %v2070
        %v2075 = vmul.f32 %v1878, %v1964
        %v2076 = vmul.f32 %v1879, %v1974
        %v2077 = vmul.f32 %v1880, %v1984
        %v2078 = vmul.f32 %v1881, %v1994
        %v2079 = vmul.f32 %v1882, %v2004
        %v2080 = vmul.f32 %v1883, %v2014
        %v2081 = vmul.f32 %v1884, %v2024
        %v2082 = vmul.f32 %v1885, %v2034
        %v2083 = vmul.f32 %v1886, %v2044
        %v2084 = vmul.f32 %v1887, %v2054
        %v2085 = vmul.f32 %v1888, %v2064
        %v2086 = vmul.f32 %v1889, %v2074
        %v2087 = vmul.f32 %v2075, %v870
        %v2088 = vmul.f32 %v2076, %v871
        %v2089 = vmul.f32 %v2077, %v872
        %v2090 = vmul.f32 %v2078, %v873
        %v2091 = vmul.f32 %v2079, %v874
        %v2092 = vmul.f32 %v2080, %v875
        %v2093 = vmul.f32 %v2081, %v876
        %v2094 = vmul.f32 %v2082, %v877
        %v2095 = vmul.f32 %v2083, %v878
        %v2096 = vmul.f32 %v2084, %v879
        %v2097 = vmul.f32 %v2085, %v880
        %v2098 = vmul.f32 %v2086, %v881
        %v2099 = vadd.f32 %v2087, %v882
        %v2100 = vadd.f32 %v2088, %v883
        %v2101 = vadd.f32 %v2089, %v884
        %v2102 = vadd.f32 %v2090, %v885
        %v2103 = vadd.f32 %v2091, %v886
        %v2104 = vadd.f32 %v2092, %v887
        %v2105 = vadd.f32 %v2093, %v888
        %v2106 = vadd.f32 %v2094, %v889
        %v2107 = vadd.f32 %v2095, %v890
        %v2108 = vadd.f32 %v2096, %v891
        %v2109 = vadd.f32 %v2097, %v892
        %v2110 = vadd.f32 %v2098, %v893
        %v2111 = vxor.u32 %v2099, 2147483648
        %v2112 = vxor.u32 %v2100, 2147483648
        %v2113 = vxor.u32 %v2101, 2147483648
        %v2114 = vxor.u32 %v2102, 2147483648
        %v2115 = vxor.u32 %v2103, 2147483648
        %v2116 = vxor.u32 %v2104, 2147483648
        %v2117 = vxor.u32 %v2105, 2147483648
        %v2118 = vxor.u32 %v2106, 2147483648
        %v2119 = vxor.u32 %v2107, 2147483648
        %v2120 = vxor.u32 %v2108, 2147483648
        %v2121 = vxor.u32 %v2109, 2147483648
        %v2122 = vxor.u32 %v2110, 2147483648
        %v2123 = vmul.f32 %v2111, 1.442695
        %v2124 = vpow.pop %v2123
        %v2125 = vmul.f32 %v2112, 1.442695
        %v2126 = vpow.pop %v2125
        %v2127 = vmul.f32 %v2113, 1.442695
        %v2128 = vpow.pop %v2127
        %v2129 = vmul.f32 %v2114, 1.442695
        %v2130 = vpow.pop %v2129
        %v2131 = vmul.f32 %v2115, 1.442695
        %v2132 = vpow.pop %v2131
        %v2133 = vmul.f32 %v2116, 1.442695
        %v2134 = vpow.pop %v2133
        %v2135 = vmul.f32 %v2117, 1.442695
        %v2136 = vpow.pop %v2135
        %v2137 = vmul.f32 %v2118, 1.442695
        %v2138 = vpow.pop %v2137
        %v2139 = vmul.f32 %v2119, 1.442695
        %v2140 = vpow.pop %v2139
        %v2141 = vmul.f32 %v2120, 1.442695
        %v2142 = vpow.pop %v2141
        %v2143 = vmul.f32 %v2121, 1.442695
        %v2144 = vpow.pop %v2143
        %v2145 = vmul.f32 %v2122, 1.442695
        %v2146 = vpow.pop %v2145
        %v2147 = vadd.f32 %v2124, 1.0
        %v2148 = vadd.f32 %v2126, 1.0
        %v2149 = vadd.f32 %v2128, 1.0
        %v2150 = vadd.f32 %v2130, 1.0
        %v2151 = vadd.f32 %v2132, 1.0
        %v2152 = vadd.f32 %v2134, 1.0
        %v2153 = vadd.f32 %v2136, 1.0
        %v2154 = vadd.f32 %v2138, 1.0
        %v2155 = vadd.f32 %v2140, 1.0
        %v2156 = vadd.f32 %v2142, 1.0
        %v2157 = vadd.f32 %v2144, 1.0
        %v2158 = vadd.f32 %v2146, 1.0
        %v2159 = vrcp.pop %v2147
        %v2160 = vmul.f32 %v2147, %v2159
        %v2161 = vsub.f32 1.0, %v2160
        %v2162 = vmul.f32 %v2159, %v2161
        %v2163 = vadd.f32 %v2159, %v2162
        %vm2164 = vweird.f32 %v2147
        %vm2165 = vweird.f32 %v2159
        %vm2166 = vmor %vm2164, %vm2165
        %v2167 = vsel %vm2166, %v2159, %v2163
        %v2168 = vand.u32 2147483647, %v2147
        %vm2169 = vcmp.eq.f32.partialorder %v2168, 8.507059e+37
        %v2170 = vand.u32 %v2147, 2147483648
        %v2171 = vor.u32 1.1754944e-38, %v2170
        %v2172 = vsel %vm2169, %v2171, %v2167
        %v2173 = vmul.f32 1.0, %v2172
        %v2174 = vrcp.pop %v2148
        %v2175 = vmul.f32 %v2148, %v2174
        %v2176 = vsub.f32 1.0, %v2175
        %v2177 = vmul.f32 %v2174, %v2176
        %v2178 = vadd.f32 %v2174, %v2177
        %vm2179 = vweird.f32 %v2148
        %vm2180 = vweird.f32 %v2174
        %vm2181 = vmor %vm2179, %vm2180
        %v2182 = vsel %vm2181, %v2174, %v2178
        %v2183 = vand.u32 2147483647, %v2148
        %vm2184 = vcmp.eq.f32.partialorder %v2183, 8.507059e+37
        %v2185 = vand.u32 %v2148, 2147483648
        %v2186 = vor.u32 1.1754944e-38, %v2185
        %v2187 = vsel %vm2184, %v2186, %v2182
        %v2188 = vmul.f32 1.0, %v2187
        %v2189 = vrcp.pop %v2149
        %v2190 = vmul.f32 %v2149, %v2189
        %v2191 = vsub.f32 1.0, %v2190
        %v2192 = vmul.f32 %v2189, %v2191
        %v2193 = vadd.f32 %v2189, %v2192
        %vm2194 = vweird.f32 %v2149
        %vm2195 = vweird.f32 %v2189
        %vm2196 = vmor %vm2194, %vm2195
        %v2197 = vsel %vm2196, %v2189, %v2193
        %v2198 = vand.u32 2147483647, %v2149
        %vm2199 = vcmp.eq.f32.partialorder %v2198, 8.507059e+37
        %v2200 = vand.u32 %v2149, 2147483648
        %v2201 = vor.u32 1.1754944e-38, %v2200
        %v2202 = vsel %vm2199, %v2201, %v2197
        %v2203 = vmul.f32 1.0, %v2202
        %v2204 = vrcp.pop %v2150
        %v2205 = vmul.f32 %v2150, %v2204
        %v2206 = vsub.f32 1.0, %v2205
        %v2207 = vmul.f32 %v2204, %v2206
        %v2208 = vadd.f32 %v2204, %v2207
        %vm2209 = vweird.f32 %v2150
        %vm2210 = vweird.f32 %v2204
        %vm2211 = vmor %vm2209, %vm2210
        %v2212 = vsel %vm2211, %v2204, %v2208
        %v2213 = vand.u32 2147483647, %v2150
        %vm2214 = vcmp.eq.f32.partialorder %v2213, 8.507059e+37
        %v2215 = vand.u32 %v2150, 2147483648
        %v2216 = vor.u32 1.1754944e-38, %v2215
        %v2217 = vsel %vm2214, %v2216, %v2212
        %v2218 = vmul.f32 1.0, %v2217
        %v2219 = vrcp.pop %v2151
        %v2220 = vmul.f32 %v2151, %v2219
        %v2221 = vsub.f32 1.0, %v2220
        %v2222 = vmul.f32 %v2219, %v2221
        %v2223 = vadd.f32 %v2219, %v2222
        %vm2224 = vweird.f32 %v2151
        %vm2225 = vweird.f32 %v2219
        %vm2226 = vmor %vm2224, %vm2225
        %v2227 = vsel %vm2226, %v2219, %v2223
        %v2228 = vand.u32 2147483647, %v2151
        %vm2229 = vcmp.eq.f32.partialorder %v2228, 8.507059e+37
        %v2230 = vand.u32 %v2151, 2147483648
        %v2231 = vor.u32 1.1754944e-38, %v2230
        %v2232 = vsel %vm2229, %v2231, %v2227
        %v2233 = vmul.f32 1.0, %v2232
        %v2234 = vrcp.pop %v2152
        %v2235 = vmul.f32 %v2152, %v2234
        %v2236 = vsub.f32 1.0, %v2235
        %v2237 = vmul.f32 %v2234, %v2236
        %v2238 = vadd.f32 %v2234, %v2237
        %vm2239 = vweird.f32 %v2152
        %vm2240 = vweird.f32 %v2234
        %vm2241 = vmor %vm2239, %vm2240
        %v2242 = vsel %vm2241, %v2234, %v2238
        %v2243 = vand.u32 2147483647, %v2152
        %vm2244 = vcmp.eq.f32.partialorder %v2243, 8.507059e+37
        %v2245 = vand.u32 %v2152, 2147483648
        %v2246 = vor.u32 1.1754944e-38, %v2245
        %v2247 = vsel %vm2244, %v2246, %v2242
        %v2248 = vmul.f32 1.0, %v2247
        %v2249 = vrcp.pop %v2153
        %v2250 = vmul.f32 %v2153, %v2249
        %v2251 = vsub.f32 1.0, %v2250
        %v2252 = vmul.f32 %v2249, %v2251
        %v2253 = vadd.f32 %v2249, %v2252
        %vm2254 = vweird.f32 %v2153
        %vm2255 = vweird.f32 %v2249
        %vm2256 = vmor %vm2254, %vm2255
        %v2257 = vsel %vm2256, %v2249, %v2253
        %v2258 = vand.u32 2147483647, %v2153
        %vm2259 = vcmp.eq.f32.partialorder %v2258, 8.507059e+37
        %v2260 = vand.u32 %v2153, 2147483648
        %v2261 = vor.u32 1.1754944e-38, %v2260
        %v2262 = vsel %vm2259, %v2261, %v2257
        %v2263 = vmul.f32 1.0, %v2262
        %v2264 = vrcp.pop %v2154
        %v2265 = vmul.f32 %v2154, %v2264
        %v2266 = vsub.f32 1.0, %v2265
        %v2267 = vmul.f32 %v2264, %v2266
        %v2268 = vadd.f32 %v2264, %v2267
        %vm2269 = vweird.f32 %v2154
        %vm2270 = vweird.f32 %v2264
        %vm2271 = vmor %vm2269, %vm2270
        %v2272 = vsel %vm2271, %v2264, %v2268
        %v2273 = vand.u32 2147483647, %v2154
        %vm2274 = vcmp.eq.f32.partialorder %v2273, 8.507059e+37
        %v2275 = vand.u32 %v2154, 2147483648
        %v2276 = vor.u32 1.1754944e-38, %v2275
        %v2277 = vsel %vm2274, %v2276, %v2272
        %v2278 = vmul.f32 1.0, %v2277
        %v2279 = vrcp.pop %v2155
        %v2280 = vmul.f32 %v2155, %v2279
        %v2281 = vsub.f32 1.0, %v2280
        %v2282 = vmul.f32 %v2279, %v2281
        %v2283 = vadd.f32 %v2279, %v2282
        %vm2284 = vweird.f32 %v2155
        %vm2285 = vweird.f32 %v2279
        %vm2286 = vmor %vm2284, %vm2285
        %v2287 = vsel %vm2286, %v2279, %v2283
        %v2288 = vand.u32 2147483647, %v2155
        %vm2289 = vcmp.eq.f32.partialorder %v2288, 8.507059e+37
        %v2290 = vand.u32 %v2155, 2147483648
        %v2291 = vor.u32 1.1754944e-38, %v2290
        %v2292 = vsel %vm2289, %v2291, %v2287
        %v2293 = vmul.f32 1.0, %v2292
        %v2294 = vrcp.pop %v2156
        %v2295 = vmul.f32 %v2156, %v2294
        %v2296 = vsub.f32 1.0, %v2295
        %v2297 = vmul.f32 %v2294, %v2296
        %v2298 = vadd.f32 %v2294, %v2297
        %vm2299 = vweird.f32 %v2156
        %vm2300 = vweird.f32 %v2294
        %vm2301 = vmor %vm2299, %vm2300
        %v2302 = vsel %vm2301, %v2294, %v2298
        %v2303 = vand.u32 2147483647, %v2156
        %vm2304 = vcmp.eq.f32.partialorder %v2303, 8.507059e+37
        %v2305 = vand.u32 %v2156, 2147483648
        %v2306 = vor.u32 1.1754944e-38, %v2305
        %v2307 = vsel %vm2304, %v2306, %v2302
        %v2308 = vmul.f32 1.0, %v2307
        %v2309 = vrcp.pop %v2157
        %v2310 = vmul.f32 %v2157, %v2309
        %v2311 = vsub.f32 1.0, %v2310
        %v2312 = vmul.f32 %v2309, %v2311
        %v2313 = vadd.f32 %v2309, %v2312
        %vm2314 = vweird.f32 %v2157
        %vm2315 = vweird.f32 %v2309
        %vm2316 = vmor %vm2314, %vm2315
        %v2317 = vsel %vm2316, %v2309, %v2313
        %v2318 = vand.u32 2147483647, %v2157
        %vm2319 = vcmp.eq.f32.partialorder %v2318, 8.507059e+37
        %v2320 = vand.u32 %v2157, 2147483648
        %v2321 = vor.u32 1.1754944e-38, %v2320
        %v2322 = vsel %vm2319, %v2321, %v2317
        %v2323 = vmul.f32 1.0, %v2322
        %v2324 = vrcp.pop %v2158
        %v2325 = vmul.f32 %v2158, %v2324
        %v2326 = vsub.f32 1.0, %v2325
        %v2327 = vmul.f32 %v2324, %v2326
        %v2328 = vadd.f32 %v2324, %v2327
        %vm2329 = vweird.f32 %v2158
        %vm2330 = vweird.f32 %v2324
        %vm2331 = vmor %vm2329, %vm2330
        %v2332 = vsel %vm2331, %v2324, %v2328
        %v2333 = vand.u32 2147483647, %v2158
        %vm2334 = vcmp.eq.f32.partialorder %v2333, 8.507059e+37
        %v2335 = vand.u32 %v2158, 2147483648
        %v2336 = vor.u32 1.1754944e-38, %v2335
        %v2337 = vsel %vm2334, %v2336, %v2332
        %v2338 = vmul.f32 1.0, %v2337
        %v2339 = vadd.f32 %v2173, 1.0
        %v2340 = vadd.f32 %v2188, 1.0
        %v2341 = vadd.f32 %v2203, 1.0
        %v2342 = vadd.f32 %v2218, 1.0
        %v2343 = vadd.f32 %v2233, 1.0
        %v2344 = vadd.f32 %v2248, 1.0
        %v2345 = vadd.f32 %v2263, 1.0
        %v2346 = vadd.f32 %v2278, 1.0
        %v2347 = vadd.f32 %v2293, 1.0
        %v2348 = vadd.f32 %v2308, 1.0
        %v2349 = vadd.f32 %v2323, 1.0
        %v2350 = vadd.f32 %v2338, 1.0
        %2352 = vset.pattern.permute.xlu0 0
        %2353 = vperm.xlu0 %2352, %v2339
        %v2354 = vpop.permute.xlu0 %2353
        %2357 = vset.pattern.permute.xlu0 0
        %2358 = vperm.xlu0 %2357, %v2340
        %v2359 = vpop.permute.xlu0 %2358
        %2362 = vset.pattern.permute.xlu0 0
        %2363 = vperm.xlu0 %2362, %v2341
        %v2364 = vpop.permute.xlu0 %2363
        %2367 = vset.pattern.permute.xlu0 0
        %2368 = vperm.xlu0 %2367, %v2342
        %v2369 = vpop.permute.xlu0 %2368
        %2372 = vset.pattern.permute.xlu0 0
        %2373 = vperm.xlu0 %2372, %v2343
        %v2374 = vpop.permute.xlu0 %2373
        %2377 = vset.pattern.permute.xlu0 0
        %2378 = vperm.xlu0 %2377, %v2344
        %v2379 = vpop.permute.xlu0 %2378
        %2382 = vset.pattern.permute.xlu0 0
        %2383 = vperm.xlu0 %2382, %v2345
        %v2384 = vpop.permute.xlu0 %2383
        %2387 = vset.pattern.permute.xlu0 0
        %2388 = vperm.xlu0 %2387, %v2346
        %v2389 = vpop.permute.xlu0 %2388
        %2392 = vset.pattern.permute.xlu0 0
        %2393 = vperm.xlu0 %2392, %v2347
        %v2394 = vpop.permute.xlu0 %2393
        %2397 = vset.pattern.permute.xlu0 0
        %2398 = vperm.xlu0 %2397, %v2348
        %v2399 = vpop.permute.xlu0 %2398
        %2402 = vset.pattern.permute.xlu0 0
        %2403 = vperm.xlu0 %2402, %v2349
        %v2404 = vpop.permute.xlu0 %2403
        %2407 = vset.pattern.permute.xlu0 0
        %2408 = vperm.xlu0 %2407, %v2350
        %v2409 = vpop.permute.xlu0 %2408
        %v2411 = vmul.f32 %v1712, %v2354
        %v2412 = vmul.f32 %v1713, %v2359
        %v2413 = vmul.f32 %v1714, %v2364
        %v2414 = vmul.f32 %v1715, %v2369
        %v2415 = vmul.f32 %v1716, %v2374
        %v2416 = vmul.f32 %v1717, %v2379
        %v2417 = vmul.f32 %v1718, %v2384
        %v2418 = vmul.f32 %v1719, %v2389
        %v2419 = vmul.f32 %v1720, %v2394
        %v2420 = vmul.f32 %v1721, %v2399
        %v2421 = vmul.f32 %v1722, %v2404
        %v2422 = vmul.f32 %v1723, %v2409
        %v2423 = vpack.c.bf16 %v2412, %v2411
        %v2424 = vpack.c.bf16 %v2414, %v2413
        %v2425 = vpack.c.bf16 %v2416, %v2415
        %v2426 = vpack.c.bf16 %v2418, %v2417
        %v2427 = vpack.c.bf16 %v2420, %v2419
        %v2428 = vpack.c.bf16 %v2422, %v2421
        %2429 = vmatpush.bf16.msra.mxu0 0
        %2430 = vmatpush.bf16.msra.mxu0 0
        %2431 = vmatpush.bf16.msra.mxu0 %v2428
        %2432 = vmatpush.bf16.msra.mxu0 %v2427
        %2433 = vmatpush.bf16.msra.mxu0 %v2426
        %2434 = vmatpush.bf16.msra.mxu0 %v2425
        %2435 = vmatpush.bf16.msra.mxu0 %v2424
        %2436 = vmatpush.bf16.msra.mxu0 %v2423
        %2437 = vmatmul.bf16.gmra.mxu0 %v1696
        %v2438 = vpop.f32.mrf.mxu0
        %v2439 = vadd.f32 0.0, %v2438
        %v2440 = vpop.f32.mrf.mxu0
        %v2441 = vadd.f32 0.0, %v2440
        %2442 = vdwg.mxu0
        %v2443 = vpack.c.bf16 %v1710, %v1708
        %v2444 = vpack.c.bf16 %v2441, %v2439
        %v2445 = vld [vmem:[%s2] sm:$0xff]
        %v2446 = vld [vmem:[%s2 + $0x8] sm:$0xff]
        %v2447 = vld [vmem:[%s2 + $0x10] sm:$0xff]
        %v2448 = vld [vmem:[%s2 + $0x18] sm:$0xff]
        %v2449 = vld [vmem:[%s2 + $0x20] sm:$0xff]
        %v2450 = vld [vmem:[%s2 + $0x28] sm:$0xff]
        %v2451 = vld [vmem:[%s2 + $0x30] sm:$0xff]
        %v2452 = vld [vmem:[%s2 + $0x38] sm:$0xff]
        %v2453 = vld [vmem:[%s2 + $0x40] sm:$0xff]
        %v2454 = vld [vmem:[%s2 + $0x48] sm:$0xff]
        %v2455 = vld [vmem:[%s2 + $0x50] sm:$0xff]
        %v2456 = vld [vmem:[%s2 + $0x58] sm:$0xff]
        %v2457 = vld [vmem:[%s2 + $0x60] sm:$0xff]
        %v2458 = vld [vmem:[%s2 + $0x68] sm:$0xff]
        %v2473 = vunpack.c.l.b16 %v2445
        %v2474 = vunpack.c.h.b16 %v2445
        %v2475 = vunpack.c.l.b16 %v2446
        %v2476 = vunpack.c.h.b16 %v2446
        %v2477 = vunpack.c.l.b16 %v2447
        %v2478 = vunpack.c.h.b16 %v2447
        %v2479 = vunpack.c.l.b16 %v2448
        %v2480 = vunpack.c.h.b16 %v2448
        %v2481 = vunpack.c.l.b16 %v2449
        %v2482 = vunpack.c.h.b16 %v2449
        %v2483 = vunpack.c.l.b16 %v2450
        %v2484 = vunpack.c.h.b16 %v2450
        %v2485 = vunpack.c.l.b16 %v2451
        %v2486 = vunpack.c.h.b16 %v2451
        %v2487 = vunpack.c.l.b16 %v2452
        %v2488 = vunpack.c.h.b16 %v2452
        %v2489 = vunpack.c.l.b16 %v2453
        %v2490 = vunpack.c.h.b16 %v2453
        %v2491 = vunpack.c.l.b16 %v2454
        %v2492 = vunpack.c.h.b16 %v2454
        %v2493 = vunpack.c.l.b16 %v2455
        %v2494 = vunpack.c.h.b16 %v2455
        %v2495 = vunpack.c.l.b16 %v2456
        %v2496 = vunpack.c.h.b16 %v2456
        %v2497 = vunpack.c.l.b16 %v2457
        %v2498 = vunpack.c.h.b16 %v2457
        %v2499 = vunpack.c.l.b16 %v2458
        %v2500 = vunpack.c.h.b16 %v2458
        %v2501 = vpack.c.b16 %v2477, %v2473
        %v2502 = vpack.c.b16 %v2478, %v2474
        %v2503 = vpack.c.b16 %v2479, %v2475
        %v2504 = vpack.c.b16 %v2480, %v2476
        %v2505 = vpack.c.b16 %v2485, %v2481
        %v2506 = vpack.c.b16 %v2486, %v2482
        %v2507 = vpack.c.b16 %v2487, %v2483
        %v2508 = vpack.c.b16 %v2488, %v2484
        %v2509 = vpack.c.b16 %v2493, %v2489
        %v2510 = vpack.c.b16 %v2494, %v2490
        %v2511 = vpack.c.b16 %v2495, %v2491
        %v2512 = vpack.c.b16 %v2496, %v2492
        %v2513 = vpack.c.b16 %v2497, %v2497
        %v2514 = vpack.c.b16 %v2498, %v2498
        %v2515 = vpack.c.b16 %v2499, %v2499
        %v2516 = vpack.c.b16 %v2500, %v2500
        %v2530 = vsel %vm923, %v2443, 0
        %v2533 = vsel %vm923, %v2444, 0
        %vm2535 = vcmask 1043456
        %v2537 = vsel %vm2535, %v2513, 0
        %v2540 = vsel %vm2535, %v2514, 0
        %v2543 = vsel %vm2535, %v2515, 0
        %v2546 = vsel %vm2535, %v2516, 0
        %2548 = vmatpush.bf16.msra.mxu0 0
        %2549 = vmatpush.bf16.msra.mxu0 0
        %2550 = vmatpush.bf16.msra.mxu0 0
        %2551 = vmatpush.bf16.msra.mxu0 0
        %2552 = vmatpush.bf16.msra.mxu0 %v2537
        %2553 = vmatpush.bf16.msra.mxu0 %v2509
        %2554 = vmatpush.bf16.msra.mxu0 %v2505
        %2555 = vmatpush.bf16.msra.mxu0 %v2501
        %2556 = vmatmul.bf16.gmra.mxu0 %v2530
        %v2557 = vpop.f32.mrf.mxu0
        %v2558 = vadd.f32 0.0, %v2557
        %v2559 = vpop.f32.mrf.mxu0
        %v2560 = vadd.f32 0.0, %v2559
        %2561 = vmatmul.bf16.gmra.mxu0 %v2533
        %v2562 = vpop.f32.mrf.mxu0
        %v2563 = vadd.f32 0.0, %v2562
        %v2564 = vpop.f32.mrf.mxu0
        %v2565 = vadd.f32 0.0, %v2564
        %2566 = vdwg.mxu0
        %2567 = vmatpush.bf16.msra.mxu0 0
        %2568 = vmatpush.bf16.msra.mxu0 0
        %2569 = vmatpush.bf16.msra.mxu0 0
        %2570 = vmatpush.bf16.msra.mxu0 0
        %2571 = vmatpush.bf16.msra.mxu0 %v2540
        %2572 = vmatpush.bf16.msra.mxu0 %v2510
        %2573 = vmatpush.bf16.msra.mxu0 %v2506
        %2574 = vmatpush.bf16.msra.mxu0 %v2502
        %2575 = vmatmul.bf16.gmra.mxu0 %v2530
        %v2576 = vpop.f32.mrf.mxu0
        %v2577 = vadd.f32 0.0, %v2576
        %v2578 = vpop.f32.mrf.mxu0
        %v2579 = vadd.f32 0.0, %v2578
        %2580 = vmatmul.bf16.gmra.mxu0 %v2533
        %v2581 = vpop.f32.mrf.mxu0
        %v2582 = vadd.f32 0.0, %v2581
        %v2583 = vpop.f32.mrf.mxu0
        %v2584 = vadd.f32 0.0, %v2583
        %2585 = vdwg.mxu0
        %2586 = vmatpush.bf16.msra.mxu0 0
        %2587 = vmatpush.bf16.msra.mxu0 0
        %2588 = vmatpush.bf16.msra.mxu0 0
        %2589 = vmatpush.bf16.msra.mxu0 0
        %2590 = vmatpush.bf16.msra.mxu0 %v2543
        %2591 = vmatpush.bf16.msra.mxu0 %v2511
        %2592 = vmatpush.bf16.msra.mxu0 %v2507
        %2593 = vmatpush.bf16.msra.mxu0 %v2503
        %2594 = vmatmul.bf16.gmra.mxu0 %v2530
        %v2595 = vpop.f32.mrf.mxu0
        %v2596 = vadd.f32 0.0, %v2595
        %v2597 = vpop.f32.mrf.mxu0
        %v2598 = vadd.f32 0.0, %v2597
        %2599 = vmatmul.bf16.gmra.mxu0 %v2533
        %v2600 = vpop.f32.mrf.mxu0
        %v2601 = vadd.f32 0.0, %v2600
        %v2602 = vpop.f32.mrf.mxu0
        %v2603 = vadd.f32 0.0, %v2602
        %2604 = vdwg.mxu0
        %2605 = vmatpush.bf16.msra.mxu0 0
        %2606 = vmatpush.bf16.msra.mxu0 0
        %2607 = vmatpush.bf16.msra.mxu0 0
        %2608 = vmatpush.bf16.msra.mxu0 0
        %2609 = vmatpush.bf16.msra.mxu0 %v2546
        %2610 = vmatpush.bf16.msra.mxu0 %v2512
        %2611 = vmatpush.bf16.msra.mxu0 %v2508
        %2612 = vmatpush.bf16.msra.mxu0 %v2504
        %2613 = vmatmul.bf16.gmra.mxu0 %v2530
        %v2614 = vpop.f32.mrf.mxu0
        %v2615 = vadd.f32 0.0, %v2614
        %v2616 = vpop.f32.mrf.mxu0
        %v2617 = vadd.f32 0.0, %v2616
        %2618 = vmatmul.bf16.gmra.mxu0 %v2533
        %v2619 = vpop.f32.mrf.mxu0
        %v2620 = vadd.f32 0.0, %v2619
        %v2621 = vpop.f32.mrf.mxu0
        %v2622 = vadd.f32 0.0, %v2621
        %2623 = vdwg.mxu0
        %2624 = vst [vmem:[%s355] sm:$0xff] %v2558
        %2625 = vst [vmem:[%s355 + $0x8] sm:$0xff] %v2577
        %2626 = vst [vmem:[%s355 + $0x10] sm:$0xff] %v2596
        %2627 = vst [vmem:[%s355 + $0x18] sm:$0xff] %v2615
        %2628 = vst [vmem:[%s355 + $0x20] sm:$0xff] %v2560
        %2629 = vst [vmem:[%s355 + $0x28] sm:$0xff] %v2579
        %2630 = vst [vmem:[%s355 + $0x30] sm:$0xff] %v2598
        %2631 = vst [vmem:[%s355 + $0x38] sm:$0xff] %v2617
        %2632 = vst [vmem:[%s355 + $0x40] sm:$0xff] %v2563
        %2633 = vst [vmem:[%s355 + $0x48] sm:$0xff] %v2582
        %2634 = vst [vmem:[%s355 + $0x50] sm:$0xff] %v2601
        %2635 = vst [vmem:[%s355 + $0x58] sm:$0xff] %v2620
        %2636 = vst [vmem:[%s355 + $0x60] sm:$0xff] %v2565
        %2637 = vst [vmem:[%s355 + $0x68] sm:$0xff] %v2584
        %2638 = vst [vmem:[%s355 + $0x70] sm:$0xff] %v2603
        %2639 = vst [vmem:[%s355 + $0x78] sm:$0xff] %v2622
        %s2640 = sand.u32 %s247, 1
        %s2641 = scalar_lea.sflag [#allocation3], %s2640
        %s2642 = sand.u32 %s247, 1
        %s2643 = smul.addr %s2642, 128
        %s2644 = scalar_lea.vmem [#allocation2], %s2643
        // Predicated region
        $region61: #{tpu_custom_call.1} parent=59 // pred_check
          %p2645 = pneg %p257
        $region62: #{tpu_custom_call.1} parent=59 // pred_check_branch
          %2647 = sbr.rel (%p2645) target = $region64
        $region63: #{tpu_custom_call.1} parent=59 // pred_region
          %s2648 = smul.u32 4, %s24
          %2650 = vsyncadd %s2641, 0
          %s2651 = smul.addr %s2648, 4
          %s2652 = smul.addr %s2651, 8
          %s2653 = scalar_lea.hbm %s10, %s2652
          %s2654 = sshll.u32 %s2644, 4
          %s2655 = int_to_ptr.vmem [resolvable:$true] %s2654
          %s2656 = sshll.u32 %s2653, 4
          %s2657 = int_to_ptr.hbm [resolvable:$true] %s2656
          %2662 = dma.vmem_to_hbm [thread:$0]  %s2655, 2048, %s2657, %s2641, 512, 512, 32
        $region64: #{tpu_custom_call.1} parent=59 // pred_fallthru
          _
      $region60: #{tpu_custom_call.1} parent=5 // pred_fallthru
        _
      %p2663 = scmp.le.s32.totalorder 2, %s19
      // Predicated region
      $region65: #{tpu_custom_call.1} parent=5 // pred_check
        %p2664 = pneg %p2663
      $region66: #{tpu_custom_call.1} parent=5 // pred_check_branch
        %2666 = sbr.rel (%p2664) target = $region68
      $region67: #{tpu_custom_call.1} parent=5 // pred_region
        %s2667 = ssub.s32 %s19, 2
        // Predicated region
        $region69: #{tpu_custom_call.1} parent=67 // pred_check
          %p2668 = pneg %p263
        $region70: #{tpu_custom_call.1} parent=67 // pred_check_branch
          %2670 = sbr.rel (%p2668) target = $region72
        $region71: #{tpu_custom_call.1} parent=67 // pred_region
          %s2671 = sand.u32 %s248, 1
          %s2672 = scalar_lea.sflag [#allocation3], %s2671
          %s2673 = sand.u32 %s248, 1
          %s2674 = smul.addr %s2673, 128
          %s2675 = scalar_lea.vmem [#allocation2], %s2674
          %2677 = dma.done %s2672, 2048
        $region72: #{tpu_custom_call.1} parent=67 // pred_fallthru
          _
      $region68: #{tpu_custom_call.1} parent=5 // pred_fallthru
        _
    $region6: #{tpu_custom_call.1} parent=1 // loop_footer
      %s23 = sadd.s32 1, %s19
    $region7: #{tpu_custom_call.1} parent=1 // loop_footer_branch
      %18 = sbr.rel target = $region3
    $region8: #{tpu_custom_call.1} parent=1 // loop_exit
      _
    %2678 = vsyncpa [#allocation3], 1
    %s2679 = scalar_lea.sflag [#allocation3], 1
    %2680 = vsyncpa %s2679, 1

</llo_original>
